<compile_context>
chip_gen: v5e
topology: v5e:2x2
jax: 0.10.0
libtpu: 0.0.40
codegen_flags: <defaults>
</compile_context>

<pallas_src>
import jax
import jax.numpy as jnp
from jax.experimental import pallas as pl
from jax.experimental.pallas import tpu as pltpu

NUM_SAGE_LAYERS = 3
_BN_EPS = 1e-5
_LANE = 128


# --------------------------------- helpers ---------------------------------
def _round_up(v, m):
    return ((v + m - 1) // m) * m


def _pad_mat(w, rows, cols):
    return jnp.pad(w, ((0, rows - w.shape[0]), (0, cols - w.shape[1])))


def _pad_vec(v, cols):
    return jnp.pad(v, (0, cols - v.shape[0]))


def _vmem_capacity_bytes():
    try:
        return int(pltpu.get_tpu_info().vmem_capacity_bytes)
    except Exception:
        return 64 * 1024 * 1024          # v7x-safe fallback (smallest physical VMEM)


def _num_tensorcores_per_chip():
    try:
        kind = jax.devices()[0].device_kind.lower()
    except Exception:
        return 1
    return 2 if ("v7" in kind or "7x" in kind) else 1


def _choose_block_b(B, N, per_graph_bytes, budget_bytes, min_steps, target_rows=512):
    """Largest divisor of B that (a) fits the VMEM budget, (b) leaves >=min_steps grid
    steps (megacore on v7x), stopping once bblk*N rows fill the MXU M dim well."""
    best = 1
    for bblk in range(1, B + 1):
        if B % bblk:
            continue
        if bblk > 1 and bblk * per_graph_bytes > budget_bytes:
            continue
        if bblk > 1 and (B // bblk) < min_steps:
            continue
        best = bblk
        if bblk * N >= target_rows:
            break
    return best


# ------------------------- conv1 (+relu, BN1 stats, deg) -------------------------
def _conv1_kernel(x_ref, adj_ref, wr_ref, wt_ref, b_ref, y_ref, deg_ref, stats_ref):
    bblk, n, cin = x_ref.shape
    hpad = wr_ref.shape[1]
    rows = bblk * n

    x = x_ref[...]                                                        # f32
    adj = adj_ref[...]                                                    # bf16
    deg = jnp.sum(adj.astype(jnp.float32), axis=-1, keepdims=True)        # (bblk,n,1)
    inv_deg = pl.reciprocal(jnp.maximum(deg, 1.0), approx=False)          # clamp(min=1)

    agg = jnp.einsum("bij,bjc->bic", adj, x.astype(jnp.bfloat16),
                     preferred_element_type=jnp.float32) * inv_deg        # (bblk,n,cin)

    # Two MXU dots summed (no lane-axis concat), M = bblk*n rows.
    h = (jnp.dot(agg.reshape(rows, cin).astype(jnp.bfloat16), wr_ref[...],
                 preferred_element_type=jnp.float32)
         + jnp.dot(x.reshape(rows, cin).astype(jnp.bfloat16), wt_ref[...],
                   preferred_element_type=jnp.float32)
         + b_ref[...])                                                    # (rows, hpad)

    # F.normalize(p=2, dim=-1, eps=1e-12) via rsqrt, then relu.
    ssq = jnp.sum(h * h, axis=-1, keepdims=True)
    h = h * jax.lax.rsqrt(jnp.maximum(ssq, 1e-24))
    h = jnp.maximum(h, 0.0)

    y_ref[...] = h.reshape(bblk, n, hpad).astype(y_ref.dtype)             # bf16
    deg_ref[...] = deg
    # Partial BatchNorm statistics (sum, sumsq); combined across blocks in the wrapper.
    stats_ref[0] = jnp.concatenate(
        [jnp.sum(h, axis=0, keepdims=True),
         jnp.sum(h * h, axis=0, keepdims=True)], axis=0)                  # (2, hpad)


def _conv1(x, adj_bf, wr, wt, b, *, bblk, cparams):
    B, N, Cin = x.shape
    Hp = wr.shape[1]
    grid = (B // bblk,)
    blk = lambda g: (g, 0, 0)
    rep = lambda g: (0, 0)
    return pl.pallas_call(
        _conv1_kernel,
        out_shape=(jax.ShapeDtypeStruct((B, N, Hp), jnp.bfloat16),
                   jax.ShapeDtypeStruct((B, N, 1), jnp.float32),
                   jax.ShapeDtypeStruct((grid[0], 2, Hp), jnp.float32)),
        grid=grid,
        in_specs=[
            pl.BlockSpec((bblk, N, Cin), blk),     # x
            pl.BlockSpec((bblk, N, N), blk),       # adj (bf16)
            pl.BlockSpec((Cin, Hp), rep),          # W_rel1
            pl.BlockSpec((Cin, Hp), rep),          # W_root1
            pl.BlockSpec((1, Hp), rep),            # b1
        ],
        out_specs=(pl.BlockSpec((bblk, N, Hp), blk),
                   pl.BlockSpec((bblk, N, 1), blk),
                   pl.BlockSpec((1, 2, Hp), blk)),
        compiler_params=cparams,
    )(x, adj_bf, wr, wt, b)


# ---------------- conv2 (+relu, BN2 stats, p2 = adj @ y2 for the final kernel) ----------------
def _conv2_kernel(y1_ref, adj_ref, deg_ref, s1_ref, t1_ref, wr_ref, wt_ref, b_ref,
                  y2_ref, p2_ref, stats_ref):
    bblk, n, hpad = y1_ref.shape
    rows = bblk * n

    # BN1 applied as a per-channel affine of the (bf16-stored) conv1 output.
    x1 = (y1_ref[...].astype(jnp.float32) * s1_ref[...][:, None, :]
          + t1_ref[...][:, None, :])

    adj = adj_ref[...]                                                    # bf16
    deg = deg_ref[...]
    inv_deg = pl.reciprocal(jnp.maximum(deg, 1.0), approx=False)

    agg = jnp.einsum("bij,bjc->bic", adj, x1.astype(jnp.bfloat16),
                     preferred_element_type=jnp.float32) * inv_deg

    h = (jnp.dot(agg.reshape(rows, hpad).astype(jnp.bfloat16), wr_ref[...],
                 preferred_element_type=jnp.float32)
         + jnp.dot(x1.reshape(rows, hpad).astype(jnp.bfloat16), wt_ref[...],
                   preferred_element_type=jnp.float32)
         + b_ref[...])
    ssq = jnp.sum(h * h, axis=-1, keepdims=True)
    h = h * jax.lax.rsqrt(jnp.maximum(ssq, 1e-24))
    h = jnp.maximum(h, 0.0)                                               # y2 (pre-BN2)

    y2_bf = h.reshape(bblk, n, hpad).astype(jnp.bfloat16)
    y2_ref[...] = y2_bf
    # Emit adj @ y2 while adj is resident so the final kernel never reads adj.
    p2_ref[...] = jnp.einsum("bij,bjc->bic", adj, y2_bf,
                             preferred_element_type=jnp.float32)
    stats_ref[0] = jnp.concatenate(
        [jnp.sum(h, axis=0, keepdims=True),
         jnp.sum(h * h, axis=0, keepdims=True)], axis=0)


def _conv2(y1, adj_bf, deg, s1, t1, wr, wt, b, *, bblk, cparams):
    B, N, Hp = y1.shape
    grid = (B // bblk,)
    blk = lambda g: (g, 0, 0)
    rep = lambda g: (0, 0)
    return pl.pallas_call(
        _conv2_kernel,
        out_shape=(jax.ShapeDtypeStruct((B, N, Hp), jnp.bfloat16),
                   jax.ShapeDtypeStruct((B, N, Hp), jnp.float32),
                   jax.ShapeDtypeStruct((grid[0], 2, Hp), jnp.float32)),
        grid=grid,
        in_specs=[
            pl.BlockSpec((bblk, N, Hp), blk),      # y1 (bf16)
            pl.BlockSpec((bblk, N, N), blk),       # adj (bf16)
            pl.BlockSpec((bblk, N, 1), blk),       # deg
            pl.BlockSpec((1, Hp), rep),            # s1
            pl.BlockSpec((1, Hp), rep),            # t1
            pl.BlockSpec((Hp, Hp), rep),           # W_rel2
            pl.BlockSpec((Hp, Hp), rep),           # W_root2
            pl.BlockSpec((1, Hp), rep),            # b2
        ],
        out_specs=(pl.BlockSpec((bblk, N, Hp), blk),
                   pl.BlockSpec((bblk, N, Hp), blk),
                   pl.BlockSpec((1, 2, Hp), blk)),
        compiler_params=cparams,
    )(y1, adj_bf, deg, s1, t1, wr, wt, b)


# ----------------- conv3 + final Linear fused (no adj, no HBM concat) -----------------
def _final_kernel(y1_ref, y2_ref, p2_ref, deg_ref, s1_ref, t1_ref, s2_ref, t2_ref,
                  wr3_ref, wt3_ref, b3_ref, wl1_ref, wl2_ref, wl3_ref, bl_ref, o_ref):
    bblk, n, hpad = y1_ref.shape
    opad = wr3_ref.shape[1]
    rows = bblk * n

    s1 = s1_ref[...][:, None, :]; t1 = t1_ref[...][:, None, :]
    s2 = s2_ref[...][:, None, :]; t2 = t2_ref[...][:, None, :]

    x1 = y1_ref[...].astype(jnp.float32) * s1 + t1                        # BN1(relu(conv1))
    x2 = y2_ref[...].astype(jnp.float32) * s2 + t2                        # BN2(relu(conv2))
    deg = deg_ref[...]
    inv_deg = pl.reciprocal(jnp.maximum(deg, 1.0), approx=False)
    # adj @ x2 reconstructed from p2 = adj @ y2 (BN affine commutes through the row-sum).
    agg3 = (p2_ref[...] * s2 + deg * t2) * inv_deg

    x1_2d = x1.reshape(rows, hpad).astype(jnp.bfloat16)
    x2_2d = x2.reshape(rows, hpad).astype(jnp.bfloat16)

    x3 = (jnp.dot(agg3.reshape(rows, hpad).astype(jnp.bfloat16), wr3_ref[...],
                  preferred_element_type=jnp.float32)
          + jnp.dot(x2_2d, wt3_ref[...], preferred_element_type=jnp.float32)
          + b3_ref[...])
    ssq = jnp.sum(x3 * x3, axis=-1, keepdims=True)
    x3 = x3 * jax.lax.rsqrt(jnp.maximum(ssq, 1e-24))                      # conv3: no relu

    # Final Linear on [x1 | x2 | x3] as three dots against row-slices of W_lin.
    out = (jnp.dot(x1_2d, wl1_ref[...], preferred_element_type=jnp.float32)
           + jnp.dot(x2_2d, wl2_ref[...], preferred_element_type=jnp.float32)
           + jnp.dot(x3.astype(jnp.bfloat16), wl3_ref[...],
                     preferred_element_type=jnp.float32)
           + bl_ref[...])
    o_ref[...] = out.reshape(bblk, n, opad)


def _final(y1, y2, p2, deg, s1, t1, s2, t2, wr3, wt3, b3, wl1, wl2, wl3, bl,
           *, bblk, cparams):
    B, N, Hp = y1.shape
    Op = wr3.shape[1]
    grid = (B // bblk,)
    blk = lambda g: (g, 0, 0)
    rep = lambda g: (0, 0)
    return pl.pallas_call(
        _final_kernel,
        out_shape=jax.ShapeDtypeStruct((B, N, Op), jnp.float32),
        grid=grid,
        in_specs=[
            pl.BlockSpec((bblk, N, Hp), blk),      # y1 (bf16)
            pl.BlockSpec((bblk, N, Hp), blk),      # y2 (bf16)
            pl.BlockSpec((bblk, N, Hp), blk),      # p2 = adj @ y2 (f32)
            pl.BlockSpec((bblk, N, 1), blk),       # deg
            pl.BlockSpec((1, Hp), rep),            # s1
            pl.BlockSpec((1, Hp), rep),            # t1
            pl.BlockSpec((1, Hp), rep),            # s2
            pl.BlockSpec((1, Hp), rep),            # t2
            pl.BlockSpec((Hp, Op), rep),           # W_rel3
            pl.BlockSpec((Hp, Op), rep),           # W_root3
            pl.BlockSpec((1, Op), rep),            # b3
            pl.BlockSpec((Hp, Op), rep),           # W_lin[:H]
            pl.BlockSpec((Hp, Op), rep),           # W_lin[H:2H]
            pl.BlockSpec((Op, Op), rep),           # W_lin[2H:2H+O]
            pl.BlockSpec((1, Op), rep),            # b_lin
        ],
        out_specs=pl.BlockSpec((bblk, N, Op), blk),
        compiler_params=cparams,
    )(y1, y2, p2, deg, s1, t1, s2, t2, wr3, wt3, b3, wl1, wl2, wl3, bl)


# -------------------------- BN stats -> per-channel affine --------------------------
def _bn_scale_shift(stats, count, gamma, beta, eps=_BN_EPS):
    # stats: (num_blocks, 2, C) partial [sum, sumsq]; tiny parameter-sized glue.
    # E[x^2]-E[x]^2 is safe here: post-relu / post-L2-normalize values lie in [0, 1].
    total = jnp.sum(stats, axis=0)                                  # (2, C)
    mean = total[0] / count
    var = jnp.maximum(total[1] / count - mean * mean, 0.0)          # biased (training fwd)
    s = gamma * jax.lax.rsqrt(var + eps)
    t = beta - mean * s
    return s.reshape(1, -1), t.reshape(1, -1)


# --------------------------- parameters & full forward ---------------------------
def init_params(key, in_channels, hidden_channels, out_channels):
    def dense(k, fan_in, fan_out, bias=True):
        kw, kb = jax.random.split(k)
        w = jax.random.normal(kw, (fan_in, fan_out), jnp.float32) * 0.1
        b = (jax.random.normal(kb, (fan_out,), jnp.float32) * 0.01) if bias else None
        return w, b

    ks = jax.random.split(key, 4)
    p = {}
    # DenseSAGEConv: lin_rel has no bias, lin_root has bias.
    for name, k, cin, cout in (("conv1", ks[0], in_channels, hidden_channels),
                               ("conv2", ks[1], hidden_channels, hidden_channels),
                               ("conv3", ks[2], hidden_channels, out_channels)):
        w_rel, _ = dense(jax.random.fold_in(k, 0), cin, cout, bias=False)
        w_root, b_root = dense(jax.random.fold_in(k, 1), cin, cout, bias=True)
        p[name] = dict(w_rel=w_rel, w_root=w_root, b_root=b_root)
    p["bn1"] = dict(gamma=jnp.ones((hidden_channels,), jnp.float32),
                    beta=jnp.zeros((hidden_channels,), jnp.float32))
    p["bn2"] = dict(gamma=jnp.ones((hidden_channels,), jnp.float32),
                    beta=jnp.zeros((hidden_channels,), jnp.float32))
    lin_in = (NUM_SAGE_LAYERS - 1) * hidden_channels + out_channels
    w_lin, b_lin = dense(ks[3], lin_in, out_channels, bias=True)
    p["lin"] = dict(w=w_lin, b=b_lin)
    return p


def sage_convolutions_forward(params, x, adj):
    B, N, Cin = x.shape
    c1, c2, c3 = params["conv1"], params["conv2"], params["conv3"]
    H = c1["w_rel"].shape[1]
    O = c3["w_rel"].shape[1]
    Hp = _round_up(H, _LANE)
    Op = _round_up(O, _LANE)
    bf = jnp.bfloat16

    # Lane-dense (128-multiple) padded weights/biases; zero pads keep the padded channels
    # exactly zero through relu, L2-normalize and the BN affine.
    wr1 = _pad_mat(c1["w_rel"], Cin, Hp).astype(bf)
    wt1 = _pad_mat(c1["w_root"], Cin, Hp).astype(bf)
    b1 = _pad_vec(c1["b_root"], Hp).reshape(1, -1)
    wr2 = _pad_mat(c2["w_rel"], Hp, Hp).astype(bf)
    wt2 = _pad_mat(c2["w_root"], Hp, Hp).astype(bf)
    b2 = _pad_vec(c2["b_root"], Hp).reshape(1, -1)
    wr3 = _pad_mat(c3["w_rel"], Hp, Op).astype(bf)
    wt3 = _pad_mat(c3["w_root"], Hp, Op).astype(bf)
    b3 = _pad_vec(c3["b_root"], Op).reshape(1, -1)

    wlin = params["lin"]["w"]
    wl1 = _pad_mat(wlin[:H], Hp, Op).astype(bf)
    wl2 = _pad_mat(wlin[H:2 * H], Hp, Op).astype(bf)
    wl3 = _pad_mat(wlin[2 * H:2 * H + O], Op, Op).astype(bf)
    bl = _pad_vec(params["lin"]["b"], Op).reshape(1, -1)

    g1 = _pad_vec(params["bn1"]["gamma"], Hp)
    be1 = _pad_vec(params["bn1"]["beta"], Hp)
    g2 = _pad_vec(params["bn2"]["gamma"], Hp)
    be2 = _pad_vec(params["bn2"]["beta"], Hp)

    adj_bf = adj.astype(bf)                       # halve adj DMA bytes / VMEM footprint

    # VMEM-aware block sizing (critical on v7x: 64 MiB physical vs 128 MiB on v5e/v6e).
    cap = _vmem_capacity_bytes()
    per_graph = 2 * (N * N * 2                                    # adj bf16 (dbl-buffered)
                     + N * (Cin * 4 + 3 * Hp * 2 + Hp * 4 + Op * 4 + 8))
    weight_bytes = 4 * (2 * Cin * Hp + 2 * Hp * Hp + 4 * Hp * Op + Op * Op)
    budget = max(cap // 2 - weight_bytes, per_graph)
    min_steps = 2 if _num_tensorcores_per_chip() >= 2 else 1      # megacore only on v7x
    bblk = _choose_block_b(B, N, per_graph, budget, min_steps)
    vmem_limit = int(min(cap * 3 // 4, 128 * 1024 * 1024))
    cparams = pltpu.CompilerParams(dimension_semantics=("parallel",),
                                   vmem_limit_bytes=vmem_limit)

    count = float(B * N)

    # conv1 (+relu): emits y1 (bf16), deg, BN1 partial stats.
    y1, deg, stats1 = _conv1(x, adj_bf, wr1, wt1, b1, bblk=bblk, cparams=cparams)
    s1, t1 = _bn_scale_shift(stats1, count, g1, be1)

    # conv2 (+relu): consumes BN1 as an in-kernel affine; emits y2 (bf16), p2 = adj@y2
    # and BN2 partial stats.  This is the last time adj is read from HBM.
    y2, p2, stats2 = _conv2(y1, adj_bf, deg, s1, t1, wr2, wt2, b2,
                            bblk=bblk, cparams=cparams)
    s2, t2 = _bn_scale_shift(stats2, count, g2, be2)

    # conv3 + final Linear fused; aggregation rebuilt from p2/deg, no adj, no HBM concat.
    out = _final(y1, y2, p2, deg, s1, t1, s2, t2, wr3, wt3, b3, wl1, wl2, wl3, bl,
                 bblk=bblk, cparams=cparams)
    return out[..., :O]


if __name__ == "__main__":
    B, N = 2, 8                       # batch of graphs, nodes per graph
    in_channels, hidden_channels, out_channels = 4, 32, 16

    key = jax.random.PRNGKey(0)
    kx, ka, kp = jax.random.split(key, 3)
    x = jax.random.normal(kx, (B, N, in_channels), jnp.float32)
    adj = jax.random.uniform(ka, (B, N, N), jnp.float32)   # dense weighted adjacency

    params = init_params(kp, in_channels, hidden_channels, out_channels)

    fwd = jax.jit(sage_convolutions_forward)
    out = fwd(params, x, adj)
    jax.block_until_ready(out)
    assert out.shape == (B, N, out_channels) and out.dtype == jnp.float32
    print("KERNEL_OK")
</pallas_src>

<mosaic_0001>
module attributes {stable_mosaic.version = 11 : i64} {
  func.func @_conv1_kernel(%arg0: i32, %arg1: memref<2x8x4xf32, #tpu.memory_space<vmem>>, %arg2: memref<2x8x8xbf16, #tpu.memory_space<vmem>>, %arg3: memref<4x128xbf16, #tpu.memory_space<vmem>>, %arg4: memref<4x128xbf16, #tpu.memory_space<vmem>>, %arg5: memref<1x128xf32, #tpu.memory_space<vmem>>, %arg6: memref<2x8x128xbf16, #tpu.memory_space<vmem>>, %arg7: memref<2x8x1xf32, #tpu.memory_space<vmem>>, %arg8: memref<1x2x128xf32, #tpu.memory_space<vmem>>) attributes {dimension_semantics = [#tpu.dimension_semantics<parallel>], iteration_bounds = array<i64: 1>, scalar_prefetch = 0 : i64, scratch_operands = 0 : i64, tpu.core_type = #tpu.core_type<tc>, window_params = [{transform_indices = @transform_0, window_bounds = array<i64: 2, 8, 4>}, {transform_indices = @transform_1, window_bounds = array<i64: 2, 8, 8>}, {pipeline_mode = #tpu.pipeline_mode<synchronous>, transform_indices = @transform_2, window_bounds = array<i64: 4, 128>}, {pipeline_mode = #tpu.pipeline_mode<synchronous>, transform_indices = @transform_3, window_bounds = array<i64: 4, 128>}, {pipeline_mode = #tpu.pipeline_mode<synchronous>, transform_indices = @transform_4, window_bounds = array<i64: 1, 128>}, {transform_indices = @transform_5, window_bounds = array<i64: 2, 8, 128>}, {transform_indices = @transform_6, window_bounds = array<i64: 2, 8, 1>}, {transform_indices = @transform_7, window_bounds = array<i64: 1, 2, 128>}]} {
    %c0 = arith.constant 0 : index
    %c0_0 = arith.constant 0 : index
    %c0_1 = arith.constant 0 : index
    %0 = vector.load %arg1[%c0, %c0_0, %c0_1] : memref<2x8x4xf32, #tpu.memory_space<vmem>>, vector<2x8x4xf32>
    %c0_2 = arith.constant 0 : index
    %c0_3 = arith.constant 0 : index
    %c0_4 = arith.constant 0 : index
    %1 = vector.load %arg2[%c0_2, %c0_3, %c0_4] : memref<2x8x8xbf16, #tpu.memory_space<vmem>>, vector<2x8x8xbf16>
    %2 = arith.extf %1 : vector<2x8x8xbf16> to vector<2x8x8xf32>
    %cst = arith.constant dense<0.000000e+00> : vector<2x8xf32>
    %3 = vector.multi_reduction <add>, %2, %cst [2] : vector<2x8x8xf32> to vector<2x8xf32>
    %4 = vector.shape_cast %3 : vector<2x8xf32> to vector<2x8x1xf32>
    %cst_5 = arith.constant 1.000000e+00 : f32
    %5 = vector.broadcast %cst_5 : f32 to vector<2x8x1xf32>
    %6 = arith.maximumf %4, %5 : vector<2x8x1xf32>
    %7 = tpu.reciprocal %6 : vector<2x8x1xf32> -> vector<2x8x1xf32>
    %8 = arith.truncf %0 : vector<2x8x4xf32> to vector<2x8x4xbf16>
    "tpu.trace_start"() <{level = 10 : i32, message = "bij,bjc->bic"}> : () -> ()
    %cst_6 = arith.constant dense<0.000000e+00> : vector<2x8x4xf32>
    %9 = tpu.matmul %1, %8, %cst_6 {dimension_numbers = #tpu.dot_dimension_numbers<[2], [1], [1], [2], [0, 0, 0, 1, 1, 2], [0], [0]>} : vector<2x8x8xbf16>, vector<2x8x4xbf16>, vector<2x8x4xf32> -> vector<2x8x4xf32>
    "tpu.trace_stop"() : () -> ()
    %10 = vector.broadcast %7 : vector<2x8x1xf32> to vector<2x8x4xf32>
    %11 = arith.mulf %9, %10 : vector<2x8x4xf32>
    %12 = vector.shape_cast %11 : vector<2x8x4xf32> to vector<16x4xf32>
    %13 = arith.truncf %12 : vector<16x4xf32> to vector<16x4xbf16>
    %c0_7 = arith.constant 0 : index
    %c0_8 = arith.constant 0 : index
    %14 = vector.load %arg3[%c0_7, %c0_8] : memref<4x128xbf16, #tpu.memory_space<vmem>>, vector<4x128xbf16>
    %cst_9 = arith.constant dense<0.000000e+00> : vector<16x128xf32>
    %15 = tpu.matmul %13, %14, %cst_9 {dimension_numbers = #tpu.dot_dimension_numbers<[1], [0], [0], [1], [0, 0, 1, 1], [], []>} : vector<16x4xbf16>, vector<4x128xbf16>, vector<16x128xf32> -> vector<16x128xf32>
    %16 = vector.shape_cast %0 : vector<2x8x4xf32> to vector<16x4xf32>
    %17 = arith.truncf %16 : vector<16x4xf32> to vector<16x4xbf16>
    %c0_10 = arith.constant 0 : index
    %c0_11 = arith.constant 0 : index
    %18 = vector.load %arg4[%c0_10, %c0_11] : memref<4x128xbf16, #tpu.memory_space<vmem>>, vector<4x128xbf16>
    %cst_12 = arith.constant dense<0.000000e+00> : vector<16x128xf32>
    %19 = tpu.matmul %17, %18, %cst_12 {dimension_numbers = #tpu.dot_dimension_numbers<[1], [0], [0], [1], [0, 0, 1, 1], [], []>} : vector<16x4xbf16>, vector<4x128xbf16>, vector<16x128xf32> -> vector<16x128xf32>
    %20 = arith.addf %15, %19 : vector<16x128xf32>
    %c0_13 = arith.constant 0 : index
    %c0_14 = arith.constant 0 : index
    %21 = vector.load %arg5[%c0_13, %c0_14] : memref<1x128xf32, #tpu.memory_space<vmem>>, vector<1x128xf32>
    %22 = vector.broadcast %21 : vector<1x128xf32> to vector<16x128xf32>
    %23 = arith.addf %20, %22 : vector<16x128xf32>
    %24 = arith.mulf %23, %23 : vector<16x128xf32>
    %cst_15 = arith.constant dense<0.000000e+00> : vector<16xf32>
    %25 = vector.multi_reduction <add>, %24, %cst_15 [1] : vector<16x128xf32> to vector<16xf32>
    %26 = vector.shape_cast %25 : vector<16xf32> to vector<16x1xf32>
    %cst_16 = arith.constant 1.000000e-24 : f32
    %27 = vector.broadcast %cst_16 : f32 to vector<16x1xf32>
    %28 = arith.maximumf %26, %27 : vector<16x1xf32>
    %29 = math.rsqrt %28 : vector<16x1xf32>
    %30 = vector.broadcast %29 : vector<16x1xf32> to vector<16x128xf32>
    %31 = arith.mulf %23, %30 : vector<16x128xf32>
    %cst_17 = arith.constant 0.000000e+00 : f32
    %32 = vector.broadcast %cst_17 : f32 to vector<16x128xf32>
    %33 = arith.maximumf %31, %32 : vector<16x128xf32>
    %34 = vector.shape_cast %33 : vector<16x128xf32> to vector<2x8x128xf32>
    %35 = arith.truncf %34 : vector<2x8x128xf32> to vector<2x8x128xbf16>
    %c0_18 = arith.constant 0 : index
    %c0_19 = arith.constant 0 : index
    %c0_20 = arith.constant 0 : index
    %36 = vector.load %arg6[%c0_18, %c0_19, %c0_20] : memref<2x8x128xbf16, #tpu.memory_space<vmem>>, vector<2x8x128xbf16>
    tpu.vector_store %arg6[%c0_18, %c0_19, %c0_20], %35 {strides = array<i32>} : memref<2x8x128xbf16, #tpu.memory_space<vmem>>, vector<2x8x128xbf16>,
    %c0_21 = arith.constant 0 : index
    %c0_22 = arith.constant 0 : index
    %c0_23 = arith.constant 0 : index
    %37 = vector.load %arg7[%c0_21, %c0_22, %c0_23] : memref<2x8x1xf32, #tpu.memory_space<vmem>>, vector<2x8x1xf32>
    tpu.vector_store %arg7[%c0_21, %c0_22, %c0_23], %4 {strides = array<i32>} : memref<2x8x1xf32, #tpu.memory_space<vmem>>, vector<2x8x1xf32>,
    %cst_24 = arith.constant dense<0.000000e+00> : vector<128xf32>
    %38 = vector.multi_reduction <add>, %33, %cst_24 [0] : vector<16x128xf32> to vector<128xf32>
    %39 = vector.shape_cast %38 : vector<128xf32> to vector<1x128xf32>
    %40 = arith.mulf %33, %33 : vector<16x128xf32>
    %cst_25 = arith.constant dense<0.000000e+00> : vector<128xf32>
    %41 = vector.multi_reduction <add>, %40, %cst_25 [0] : vector<16x128xf32> to vector<128xf32>
    %42 = vector.shape_cast %41 : vector<128xf32> to vector<1x128xf32>
    %43 = tpu.concatenate %39, %42 in 0 : vector<1x128xf32>, vector<1x128xf32> -> vector<2x128xf32>
    %c0_26 = arith.constant 0 : index
    %c0_27 = arith.constant 0 : index
    %c0_28 = arith.constant 0 : index
    %44 = vector.load %arg8[%c0_26, %c0_27, %c0_28] : memref<1x2x128xf32, #tpu.memory_space<vmem>>, vector<1x2x128xf32>
    %45 = vector.shape_cast %44 : vector<1x2x128xf32> to vector<2x128xf32>
    %46 = vector.shape_cast %43 : vector<2x128xf32> to vector<1x2x128xf32>
    tpu.vector_store %arg8[%c0_26, %c0_27, %c0_28], %46 {strides = array<i32>} : memref<1x2x128xf32, #tpu.memory_space<vmem>>, vector<1x2x128xf32>,
    return
  }
  func.func @transform_0(%arg0: i32) -> (i32, i32, i32) {
    %c0_i32 = arith.constant 0 : i32
    %c0_i32_0 = arith.constant 0 : i32
    %c0_i32_1 = arith.constant 0 : i32
    return %arg0, %c0_i32, %c0_i32_0 : i32, i32, i32
  }
  func.func @transform_1(%arg0: i32) -> (i32, i32, i32) {
    %c0_i32 = arith.constant 0 : i32
    %c0_i32_0 = arith.constant 0 : i32
    %c0_i32_1 = arith.constant 0 : i32
    return %arg0, %c0_i32, %c0_i32_0 : i32, i32, i32
  }
  func.func @transform_2(%arg0: i32) -> (i32, i32) {
    %c0_i32 = arith.constant 0 : i32
    %c0_i32_0 = arith.constant 0 : i32
    %c0_i32_1 = arith.constant 0 : i32
    return %c0_i32, %c0_i32_0 : i32, i32
  }
  func.func @transform_3(%arg0: i32) -> (i32, i32) {
    %c0_i32 = arith.constant 0 : i32
    %c0_i32_0 = arith.constant 0 : i32
    %c0_i32_1 = arith.constant 0 : i32
    return %c0_i32, %c0_i32_0 : i32, i32
  }
  func.func @transform_4(%arg0: i32) -> (i32, i32) {
    %c0_i32 = arith.constant 0 : i32
    %c0_i32_0 = arith.constant 0 : i32
    %c0_i32_1 = arith.constant 0 : i32
    return %c0_i32, %c0_i32_0 : i32, i32
  }
  func.func @transform_5(%arg0: i32) -> (i32, i32, i32) {
    %c0_i32 = arith.constant 0 : i32
    %c0_i32_0 = arith.constant 0 : i32
    %c0_i32_1 = arith.constant 0 : i32
    return %arg0, %c0_i32, %c0_i32_0 : i32, i32, i32
  }
  func.func @transform_6(%arg0: i32) -> (i32, i32, i32) {
    %c0_i32 = arith.constant 0 : i32
    %c0_i32_0 = arith.constant 0 : i32
    %c0_i32_1 = arith.constant 0 : i32
    return %arg0, %c0_i32, %c0_i32_0 : i32, i32, i32
  }
  func.func @transform_7(%arg0: i32) -> (i32, i32, i32) {
    %c0_i32 = arith.constant 0 : i32
    %c0_i32_0 = arith.constant 0 : i32
    %c0_i32_1 = arith.constant 0 : i32
    return %arg0, %c0_i32, %c0_i32_0 : i32, i32, i32
  }
}

module attributes {stable_mosaic.version = 11 : i64} {
  func.func @_conv2_kernel(%arg0: i32, %arg1: memref<2x8x128xbf16, #tpu.memory_space<vmem>>, %arg2: memref<2x8x8xbf16, #tpu.memory_space<vmem>>, %arg3: memref<2x8x1xf32, #tpu.memory_space<vmem>>, %arg4: memref<1x128xf32, #tpu.memory_space<vmem>>, %arg5: memref<1x128xf32, #tpu.memory_space<vmem>>, %arg6: memref<128x128xbf16, #tpu.memory_space<vmem>>, %arg7: memref<128x128xbf16, #tpu.memory_space<vmem>>, %arg8: memref<1x128xf32, #tpu.memory_space<vmem>>, %arg9: memref<2x8x128xbf16, #tpu.memory_space<vmem>>, %arg10: memref<2x8x128xf32, #tpu.memory_space<vmem>>, %arg11: memref<1x2x128xf32, #tpu.memory_space<vmem>>) attributes {dimension_semantics = [#tpu.dimension_semantics<parallel>], iteration_bounds = array<i64: 1>, scalar_prefetch = 0 : i64, scratch_operands = 0 : i64, tpu.core_type = #tpu.core_type<tc>, window_params = [{transform_indices = @transform_0, window_bounds = array<i64: 2, 8, 128>}, {transform_indices = @transform_1, window_bounds = array<i64: 2, 8, 8>}, {transform_indices = @transform_2, window_bounds = array<i64: 2, 8, 1>}, {pipeline_mode = #tpu.pipeline_mode<synchronous>, transform_indices = @transform_3, window_bounds = array<i64: 1, 128>}, {pipeline_mode = #tpu.pipeline_mode<synchronous>, transform_indices = @transform_4, window_bounds = array<i64: 1, 128>}, {pipeline_mode = #tpu.pipeline_mode<synchronous>, transform_indices = @transform_5, window_bounds = array<i64: 128, 128>}, {pipeline_mode = #tpu.pipeline_mode<synchronous>, transform_indices = @transform_6, window_bounds = array<i64: 128, 128>}, {pipeline_mode = #tpu.pipeline_mode<synchronous>, transform_indices = @transform_7, window_bounds = array<i64: 1, 128>}, {transform_indices = @transform_8, window_bounds = array<i64: 2, 8, 128>}, {transform_indices = @transform_9, window_bounds = array<i64: 2, 8, 128>}, {transform_indices = @transform_10, window_bounds = array<i64: 1, 2, 128>}]} {
    %c0 = arith.constant 0 : index
    %c0_0 = arith.constant 0 : index
    %c0_1 = arith.constant 0 : index
    %0 = vector.load %arg1[%c0, %c0_0, %c0_1] : memref<2x8x128xbf16, #tpu.memory_space<vmem>>, vector<2x8x128xbf16>
    %1 = arith.extf %0 : vector<2x8x128xbf16> to vector<2x8x128xf32>
    %c0_2 = arith.constant 0 : index
    %c0_3 = arith.constant 0 : index
    %2 = vector.load %arg4[%c0_2, %c0_3] : memref<1x128xf32, #tpu.memory_space<vmem>>, vector<1x128xf32>
    %3 = vector.shape_cast %2 : vector<1x128xf32> to vector<1x1x128xf32>
    %4 = vector.broadcast %3 : vector<1x1x128xf32> to vector<2x8x128xf32>
    %5 = arith.mulf %1, %4 : vector<2x8x128xf32>
    %c0_4 = arith.constant 0 : index
    %c0_5 = arith.constant 0 : index
    %6 = vector.load %arg5[%c0_4, %c0_5] : memref<1x128xf32, #tpu.memory_space<vmem>>, vector<1x128xf32>
    %7 = vector.shape_cast %6 : vector<1x128xf32> to vector<1x1x128xf32>
    %8 = vector.broadcast %7 : vector<1x1x128xf32> to vector<2x8x128xf32>
    %9 = arith.addf %5, %8 : vector<2x8x128xf32>
    %c0_6 = arith.constant 0 : index
    %c0_7 = arith.constant 0 : index
    %c0_8 = arith.constant 0 : index
    %10 = vector.load %arg2[%c0_6, %c0_7, %c0_8] : memref<2x8x8xbf16, #tpu.memory_space<vmem>>, vector<2x8x8xbf16>
    %c0_9 = arith.constant 0 : index
    %c0_10 = arith.constant 0 : index
    %c0_11 = arith.constant 0 : index
    %11 = vector.load %arg3[%c0_9, %c0_10, %c0_11] : memref<2x8x1xf32, #tpu.memory_space<vmem>>, vector<2x8x1xf32>
    %cst = arith.constant 1.000000e+00 : f32
    %12 = vector.broadcast %cst : f32 to vector<2x8x1xf32>
    %13 = arith.maximumf %11, %12 : vector<2x8x1xf32>
    %14 = tpu.reciprocal %13 : vector<2x8x1xf32> -> vector<2x8x1xf32>
    %15 = arith.truncf %9 : vector<2x8x128xf32> to vector<2x8x128xbf16>
    "tpu.trace_start"() <{level = 10 : i32, message = "bij,bjc->bic"}> : () -> ()
    %cst_12 = arith.constant dense<0.000000e+00> : vector<2x8x128xf32>
    %16 = tpu.matmul %10, %15, %cst_12 {dimension_numbers = #tpu.dot_dimension_numbers<[2], [1], [1], [2], [0, 0, 0, 1, 1, 2], [0], [0]>} : vector<2x8x8xbf16>, vector<2x8x128xbf16>, vector<2x8x128xf32> -> vector<2x8x128xf32>
    "tpu.trace_stop"() : () -> ()
    %17 = vector.broadcast %14 : vector<2x8x1xf32> to vector<2x8x128xf32>
    %18 = arith.mulf %16, %17 : vector<2x8x128xf32>
    %19 = vector.shape_cast %18 : vector<2x8x128xf32> to vector<16x128xf32>
    %20 = arith.truncf %19 : vector<16x128xf32> to vector<16x128xbf16>
    %c0_13 = arith.constant 0 : index
    %c0_14 = arith.constant 0 : index
    %21 = vector.load %arg6[%c0_13, %c0_14] : memref<128x128xbf16, #tpu.memory_space<vmem>>, vector<128x128xbf16>
    %cst_15 = arith.constant dense<0.000000e+00> : vector<16x128xf32>
    %22 = tpu.matmul %20, %21, %cst_15 {dimension_numbers = #tpu.dot_dimension_numbers<[1], [0], [0], [1], [0, 0, 1, 1], [], []>} : vector<16x128xbf16>, vector<128x128xbf16>, vector<16x128xf32> -> vector<16x128xf32>
    %23 = vector.shape_cast %9 : vector<2x8x128xf32> to vector<16x128xf32>
    %24 = arith.truncf %23 : vector<16x128xf32> to vector<16x128xbf16>
    %c0_16 = arith.constant 0 : index
    %c0_17 = arith.constant 0 : index
    %25 = vector.load %arg7[%c0_16, %c0_17] : memref<128x128xbf16, #tpu.memory_space<vmem>>, vector<128x128xbf16>
    %cst_18 = arith.constant dense<0.000000e+00> : vector<16x128xf32>
    %26 = tpu.matmul %24, %25, %cst_18 {dimension_numbers = #tpu.dot_dimension_numbers<[1], [0], [0], [1], [0, 0, 1, 1], [], []>} : vector<16x128xbf16>, vector<128x128xbf16>, vector<16x128xf32> -> vector<16x128xf32>
    %27 = arith.addf %22, %26 : vector<16x128xf32>
    %c0_19 = arith.constant 0 : index
    %c0_20 = arith.constant 0 : index
    %28 = vector.load %arg8[%c0_19, %c0_20] : memref<1x128xf32, #tpu.memory_space<vmem>>, vector<1x128xf32>
    %29 = vector.broadcast %28 : vector<1x128xf32> to vector<16x128xf32>
    %30 = arith.addf %27, %29 : vector<16x128xf32>
    %31 = arith.mulf %30, %30 : vector<16x128xf32>
    %cst_21 = arith.constant dense<0.000000e+00> : vector<16xf32>
    %32 = vector.multi_reduction <add>, %31, %cst_21 [1] : vector<16x128xf32> to vector<16xf32>
    %33 = vector.shape_cast %32 : vector<16xf32> to vector<16x1xf32>
    %cst_22 = arith.constant 1.000000e-24 : f32
    %34 = vector.broadcast %cst_22 : f32 to vector<16x1xf32>
    %35 = arith.maximumf %33, %34 : vector<16x1xf32>
    %36 = math.rsqrt %35 : vector<16x1xf32>
    %37 = vector.broadcast %36 : vector<16x1xf32> to vector<16x128xf32>
    %38 = arith.mulf %30, %37 : vector<16x128xf32>
    %cst_23 = arith.constant 0.000000e+00 : f32
    %39 = vector.broadcast %cst_23 : f32 to vector<16x128xf32>
    %40 = arith.maximumf %38, %39 : vector<16x128xf32>
    %41 = vector.shape_cast %40 : vector<16x128xf32> to vector<2x8x128xf32>
    %42 = arith.truncf %41 : vector<2x8x128xf32> to vector<2x8x128xbf16>
    %c0_24 = arith.constant 0 : index
    %c0_25 = arith.constant 0 : index
    %c0_26 = arith.constant 0 : index
    %43 = vector.load %arg9[%c0_24, %c0_25, %c0_26] : memref<2x8x128xbf16, #tpu.memory_space<vmem>>, vector<2x8x128xbf16>
    tpu.vector_store %arg9[%c0_24, %c0_25, %c0_26], %42 {strides = array<i32>} : memref<2x8x128xbf16, #tpu.memory_space<vmem>>, vector<2x8x128xbf16>,
    "tpu.trace_start"() <{level = 10 : i32, message = "bij,bjc->bic"}> : () -> ()
    %cst_27 = arith.constant dense<0.000000e+00> : vector<2x8x128xf32>
    %44 = tpu.matmul %10, %42, %cst_27 {dimension_numbers = #tpu.dot_dimension_numbers<[2], [1], [1], [2], [0, 0, 0, 1, 1, 2], [0], [0]>} : vector<2x8x8xbf16>, vector<2x8x128xbf16>, vector<2x8x128xf32> -> vector<2x8x128xf32>
    "tpu.trace_stop"() : () -> ()
    %c0_28 = arith.constant 0 : index
    %c0_29 = arith.constant 0 : index
    %c0_30 = arith.constant 0 : index
    %45 = vector.load %arg10[%c0_28, %c0_29, %c0_30] : memref<2x8x128xf32, #tpu.memory_space<vmem>>, vector<2x8x128xf32>
    tpu.vector_store %arg10[%c0_28, %c0_29, %c0_30], %44 {strides = array<i32>} : memref<2x8x128xf32, #tpu.memory_space<vmem>>, vector<2x8x128xf32>,
    %cst_31 = arith.constant dense<0.000000e+00> : vector<128xf32>
    %46 = vector.multi_reduction <add>, %40, %cst_31 [0] : vector<16x128xf32> to vector<128xf32>
    %47 = vector.shape_cast %46 : vector<128xf32> to vector<1x128xf32>
    %48 = arith.mulf %40, %40 : vector<16x128xf32>
    %cst_32 = arith.constant dense<0.000000e+00> : vector<128xf32>
    %49 = vector.multi_reduction <add>, %48, %cst_32 [0] : vector<16x128xf32> to vector<128xf32>
    %50 = vector.shape_cast %49 : vector<128xf32> to vector<1x128xf32>
    %51 = tpu.concatenate %47, %50 in 0 : vector<1x128xf32>, vector<1x128xf32> -> vector<2x128xf32>
    %c0_33 = arith.constant 0 : index
    %c0_34 = arith.constant 0 : index
    %c0_35 = arith.constant 0 : index
    %52 = vector.load %arg11[%c0_33, %c0_34, %c0_35] : memref<1x2x128xf32, #tpu.memory_space<vmem>>, vector<1x2x128xf32>
    %53 = vector.shape_cast %52 : vector<1x2x128xf32> to vector<2x128xf32>
    %54 = vector.shape_cast %51 : vector<2x128xf32> to vector<1x2x128xf32>
    tpu.vector_store %arg11[%c0_33, %c0_34, %c0_35], %54 {strides = array<i32>} : memref<1x2x128xf32, #tpu.memory_space<vmem>>, vector<1x2x128xf32>,
    return
  }
  func.func @transform_0(%arg0: i32) -> (i32, i32, i32) {
    %c0_i32 = arith.constant 0 : i32
    %c0_i32_0 = arith.constant 0 : i32
    %c0_i32_1 = arith.constant 0 : i32
    return %arg0, %c0_i32, %c0_i32_0 : i32, i32, i32
  }
  func.func @transform_1(%arg0: i32) -> (i32, i32, i32) {
    %c0_i32 = arith.constant 0 : i32
    %c0_i32_0 = arith.constant 0 : i32
    %c0_i32_1 = arith.constant 0 : i32
    return %arg0, %c0_i32, %c0_i32_0 : i32, i32, i32
  }
  func.func @transform_2(%arg0: i32) -> (i32, i32, i32) {
    %c0_i32 = arith.constant 0 : i32
    %c0_i32_0 = arith.constant 0 : i32
    %c0_i32_1 = arith.constant 0 : i32
    return %arg0, %c0_i32, %c0_i32_0 : i32, i32, i32
  }
  func.func @transform_3(%arg0: i32) -> (i32, i32) {
    %c0_i32 = arith.constant 0 : i32
    %c0_i32_0 = arith.constant 0 : i32
    %c0_i32_1 = arith.constant 0 : i32
    return %c0_i32, %c0_i32_0 : i32, i32
  }
  func.func @transform_4(%arg0: i32) -> (i32, i32) {
    %c0_i32 = arith.constant 0 : i32
    %c0_i32_0 = arith.constant 0 : i32
    %c0_i32_1 = arith.constant 0 : i32
    return %c0_i32, %c0_i32_0 : i32, i32
  }
  func.func @transform_5(%arg0: i32) -> (i32, i32) {
    %c0_i32 = arith.constant 0 : i32
    %c0_i32_0 = arith.constant 0 : i32
    %c0_i32_1 = arith.constant 0 : i32
    return %c0_i32, %c0_i32_0 : i32, i32
  }
  func.func @transform_6(%arg0: i32) -> (i32, i32) {
    %c0_i32 = arith.constant 0 : i32
    %c0_i32_0 = arith.constant 0 : i32
    %c0_i32_1 = arith.constant 0 : i32
    return %c0_i32, %c0_i32_0 : i32, i32
  }
  func.func @transform_7(%arg0: i32) -> (i32, i32) {
    %c0_i32 = arith.constant 0 : i32
    %c0_i32_0 = arith.constant 0 : i32
    %c0_i32_1 = arith.constant 0 : i32
    return %c0_i32, %c0_i32_0 : i32, i32
  }
  func.func @transform_8(%arg0: i32) -> (i32, i32, i32) {
    %c0_i32 = arith.constant 0 : i32
    %c0_i32_0 = arith.constant 0 : i32
    %c0_i32_1 = arith.constant 0 : i32
    return %arg0, %c0_i32, %c0_i32_0 : i32, i32, i32
  }
  func.func @transform_9(%arg0: i32) -> (i32, i32, i32) {
    %c0_i32 = arith.constant 0 : i32
    %c0_i32_0 = arith.constant 0 : i32
    %c0_i32_1 = arith.constant 0 : i32
    return %arg0, %c0_i32, %c0_i32_0 : i32, i32, i32
  }
  func.func @transform_10(%arg0: i32) -> (i32, i32, i32) {
    %c0_i32 = arith.constant 0 : i32
    %c0_i32_0 = arith.constant 0 : i32
    %c0_i32_1 = arith.constant 0 : i32
    return %arg0, %c0_i32, %c0_i32_0 : i32, i32, i32
  }
}

module attributes {stable_mosaic.version = 11 : i64} {
  func.func @_final_kernel(%arg0: i32, %arg1: memref<2x8x128xbf16, #tpu.memory_space<vmem>>, %arg2: memref<2x8x128xbf16, #tpu.memory_space<vmem>>, %arg3: memref<2x8x128xf32, #tpu.memory_space<vmem>>, %arg4: memref<2x8x1xf32, #tpu.memory_space<vmem>>, %arg5: memref<1x128xf32, #tpu.memory_space<vmem>>, %arg6: memref<1x128xf32, #tpu.memory_space<vmem>>, %arg7: memref<1x128xf32, #tpu.memory_space<vmem>>, %arg8: memref<1x128xf32, #tpu.memory_space<vmem>>, %arg9: memref<128x128xbf16, #tpu.memory_space<vmem>>, %arg10: memref<128x128xbf16, #tpu.memory_space<vmem>>, %arg11: memref<1x128xf32, #tpu.memory_space<vmem>>, %arg12: memref<128x128xbf16, #tpu.memory_space<vmem>>, %arg13: memref<128x128xbf16, #tpu.memory_space<vmem>>, %arg14: memref<128x128xbf16, #tpu.memory_space<vmem>>, %arg15: memref<1x128xf32, #tpu.memory_space<vmem>>, %arg16: memref<2x8x128xf32, #tpu.memory_space<vmem>>) attributes {dimension_semantics = [#tpu.dimension_semantics<parallel>], iteration_bounds = array<i64: 1>, scalar_prefetch = 0 : i64, scratch_operands = 0 : i64, tpu.core_type = #tpu.core_type<tc>, window_params = [{transform_indices = @transform_0, window_bounds = array<i64: 2, 8, 128>}, {transform_indices = @transform_1, window_bounds = array<i64: 2, 8, 128>}, {transform_indices = @transform_2, window_bounds = array<i64: 2, 8, 128>}, {transform_indices = @transform_3, window_bounds = array<i64: 2, 8, 1>}, {pipeline_mode = #tpu.pipeline_mode<synchronous>, transform_indices = @transform_4, window_bounds = array<i64: 1, 128>}, {pipeline_mode = #tpu.pipeline_mode<synchronous>, transform_indices = @transform_5, window_bounds = array<i64: 1, 128>}, {pipeline_mode = #tpu.pipeline_mode<synchronous>, transform_indices = @transform_6, window_bounds = array<i64: 1, 128>}, {pipeline_mode = #tpu.pipeline_mode<synchronous>, transform_indices = @transform_7, window_bounds = array<i64: 1, 128>}, {pipeline_mode = #tpu.pipeline_mode<synchronous>, transform_indices = @transform_8, window_bounds = array<i64: 128, 128>}, {pipeline_mode = #tpu.pipeline_mode<synchronous>, transform_indices = @transform_9, window_bounds = array<i64: 128, 128>}, {pipeline_mode = #tpu.pipeline_mode<synchronous>, transform_indices = @transform_10, window_bounds = array<i64: 1, 128>}, {pipeline_mode = #tpu.pipeline_mode<synchronous>, transform_indices = @transform_11, window_bounds = array<i64: 128, 128>}, {pipeline_mode = #tpu.pipeline_mode<synchronous>, transform_indices = @transform_12, window_bounds = array<i64: 128, 128>}, {pipeline_mode = #tpu.pipeline_mode<synchronous>, transform_indices = @transform_13, window_bounds = array<i64: 128, 128>}, {pipeline_mode = #tpu.pipeline_mode<synchronous>, transform_indices = @transform_14, window_bounds = array<i64: 1, 128>}, {transform_indices = @transform_15, window_bounds = array<i64: 2, 8, 128>}]} {
    %c0 = arith.constant 0 : index
    %c0_0 = arith.constant 0 : index
    %0 = vector.load %arg5[%c0, %c0_0] : memref<1x128xf32, #tpu.memory_space<vmem>>, vector<1x128xf32>
    %1 = vector.shape_cast %0 : vector<1x128xf32> to vector<1x1x128xf32>
    %c0_1 = arith.constant 0 : index
    %c0_2 = arith.constant 0 : index
    %2 = vector.load %arg6[%c0_1, %c0_2] : memref<1x128xf32, #tpu.memory_space<vmem>>, vector<1x128xf32>
    %3 = vector.shape_cast %2 : vector<1x128xf32> to vector<1x1x128xf32>
    %c0_3 = arith.constant 0 : index
    %c0_4 = arith.constant 0 : index
    %4 = vector.load %arg7[%c0_3, %c0_4] : memref<1x128xf32, #tpu.memory_space<vmem>>, vector<1x128xf32>
    %5 = vector.shape_cast %4 : vector<1x128xf32> to vector<1x1x128xf32>
    %c0_5 = arith.constant 0 : index
    %c0_6 = arith.constant 0 : index
    %6 = vector.load %arg8[%c0_5, %c0_6] : memref<1x128xf32, #tpu.memory_space<vmem>>, vector<1x128xf32>
    %7 = vector.shape_cast %6 : vector<1x128xf32> to vector<1x1x128xf32>
    %c0_7 = arith.constant 0 : index
    %c0_8 = arith.constant 0 : index
    %c0_9 = arith.constant 0 : index
    %8 = vector.load %arg1[%c0_7, %c0_8, %c0_9] : memref<2x8x128xbf16, #tpu.memory_space<vmem>>, vector<2x8x128xbf16>
    %9 = arith.extf %8 : vector<2x8x128xbf16> to vector<2x8x128xf32>
    %10 = vector.broadcast %1 : vector<1x1x128xf32> to vector<2x8x128xf32>
    %11 = arith.mulf %9, %10 : vector<2x8x128xf32>
    %12 = vector.broadcast %3 : vector<1x1x128xf32> to vector<2x8x128xf32>
    %13 = arith.addf %11, %12 : vector<2x8x128xf32>
    %c0_10 = arith.constant 0 : index
    %c0_11 = arith.constant 0 : index
    %c0_12 = arith.constant 0 : index
    %14 = vector.load %arg2[%c0_10, %c0_11, %c0_12] : memref<2x8x128xbf16, #tpu.memory_space<vmem>>, vector<2x8x128xbf16>
    %15 = arith.extf %14 : vector<2x8x128xbf16> to vector<2x8x128xf32>
    %16 = vector.broadcast %5 : vector<1x1x128xf32> to vector<2x8x128xf32>
    %17 = arith.mulf %15, %16 : vector<2x8x128xf32>
    %18 = vector.broadcast %7 : vector<1x1x128xf32> to vector<2x8x128xf32>
    %19 = arith.addf %17, %18 : vector<2x8x128xf32>
    %c0_13 = arith.constant 0 : index
    %c0_14 = arith.constant 0 : index
    %c0_15 = arith.constant 0 : index
    %20 = vector.load %arg4[%c0_13, %c0_14, %c0_15] : memref<2x8x1xf32, #tpu.memory_space<vmem>>, vector<2x8x1xf32>
    %cst = arith.constant 1.000000e+00 : f32
    %21 = vector.broadcast %cst : f32 to vector<2x8x1xf32>
    %22 = arith.maximumf %20, %21 : vector<2x8x1xf32>
    %23 = tpu.reciprocal %22 : vector<2x8x1xf32> -> vector<2x8x1xf32>
    %c0_16 = arith.constant 0 : index
    %c0_17 = arith.constant 0 : index
    %c0_18 = arith.constant 0 : index
    %24 = vector.load %arg3[%c0_16, %c0_17, %c0_18] : memref<2x8x128xf32, #tpu.memory_space<vmem>>, vector<2x8x128xf32>
    %25 = vector.broadcast %5 : vector<1x1x128xf32> to vector<2x8x128xf32>
    %26 = arith.mulf %24, %25 : vector<2x8x128xf32>
    %27 = vector.broadcast %20 : vector<2x8x1xf32> to vector<2x8x128xf32>
    %28 = vector.broadcast %7 : vector<1x1x128xf32> to vector<2x8x128xf32>
    %29 = arith.mulf %27, %28 : vector<2x8x128xf32>
    %30 = arith.addf %26, %29 : vector<2x8x128xf32>
    %31 = vector.broadcast %23 : vector<2x8x1xf32> to vector<2x8x128xf32>
    %32 = arith.mulf %30, %31 : vector<2x8x128xf32>
    %33 = vector.shape_cast %13 : vector<2x8x128xf32> to vector<16x128xf32>
    %34 = arith.truncf %33 : vector<16x128xf32> to vector<16x128xbf16>
    %35 = vector.shape_cast %19 : vector<2x8x128xf32> to vector<16x128xf32>
    %36 = arith.truncf %35 : vector<16x128xf32> to vector<16x128xbf16>
    %37 = vector.shape_cast %32 : vector<2x8x128xf32> to vector<16x128xf32>
    %38 = arith.truncf %37 : vector<16x128xf32> to vector<16x128xbf16>
    %c0_19 = arith.constant 0 : index
    %c0_20 = arith.constant 0 : index
    %39 = vector.load %arg9[%c0_19, %c0_20] : memref<128x128xbf16, #tpu.memory_space<vmem>>, vector<128x128xbf16>
    %cst_21 = arith.constant dense<0.000000e+00> : vector<16x128xf32>
    %40 = tpu.matmul %38, %39, %cst_21 {dimension_numbers = #tpu.dot_dimension_numbers<[1], [0], [0], [1], [0, 0, 1, 1], [], []>} : vector<16x128xbf16>, vector<128x128xbf16>, vector<16x128xf32> -> vector<16x128xf32>
    %c0_22 = arith.constant 0 : index
    %c0_23 = arith.constant 0 : index
    %41 = vector.load %arg10[%c0_22, %c0_23] : memref<128x128xbf16, #tpu.memory_space<vmem>>, vector<128x128xbf16>
    %cst_24 = arith.constant dense<0.000000e+00> : vector<16x128xf32>
    %42 = tpu.matmul %36, %41, %cst_24 {dimension_numbers = #tpu.dot_dimension_numbers<[1], [0], [0], [1], [0, 0, 1, 1], [], []>} : vector<16x128xbf16>, vector<128x128xbf16>, vector<16x128xf32> -> vector<16x128xf32>
    %43 = arith.addf %40, %42 : vector<16x128xf32>
    %c0_25 = arith.constant 0 : index
    %c0_26 = arith.constant 0 : index
    %44 = vector.load %arg11[%c0_25, %c0_26] : memref<1x128xf32, #tpu.memory_space<vmem>>, vector<1x128xf32>
    %45 = vector.broadcast %44 : vector<1x128xf32> to vector<16x128xf32>
    %46 = arith.addf %43, %45 : vector<16x128xf32>
    %47 = arith.mulf %46, %46 : vector<16x128xf32>
    %cst_27 = arith.constant dense<0.000000e+00> : vector<16xf32>
    %48 = vector.multi_reduction <add>, %47, %cst_27 [1] : vector<16x128xf32> to vector<16xf32>
    %49 = vector.shape_cast %48 : vector<16xf32> to vector<16x1xf32>
    %cst_28 = arith.constant 1.000000e-24 : f32
    %50 = vector.broadcast %cst_28 : f32 to vector<16x1xf32>
    %51 = arith.maximumf %49, %50 : vector<16x1xf32>
    %52 = math.rsqrt %51 : vector<16x1xf32>
    %53 = vector.broadcast %52 : vector<16x1xf32> to vector<16x128xf32>
    %54 = arith.mulf %46, %53 : vector<16x128xf32>
    %c0_29 = arith.constant 0 : index
    %c0_30 = arith.constant 0 : index
    %55 = vector.load %arg12[%c0_29, %c0_30] : memref<128x128xbf16, #tpu.memory_space<vmem>>, vector<128x128xbf16>
    %cst_31 = arith.constant dense<0.000000e+00> : vector<16x128xf32>
    %56 = tpu.matmul %34, %55, %cst_31 {dimension_numbers = #tpu.dot_dimension_numbers<[1], [0], [0], [1], [0, 0, 1, 1], [], []>} : vector<16x128xbf16>, vector<128x128xbf16>, vector<16x128xf32> -> vector<16x128xf32>
    %c0_32 = arith.constant 0 : index
    %c0_33 = arith.constant 0 : index
    %57 = vector.load %arg13[%c0_32, %c0_33] : memref<128x128xbf16, #tpu.memory_space<vmem>>, vector<128x128xbf16>
    %cst_34 = arith.constant dense<0.000000e+00> : vector<16x128xf32>
    %58 = tpu.matmul %36, %57, %cst_34 {dimension_numbers = #tpu.dot_dimension_numbers<[1], [0], [0], [1], [0, 0, 1, 1], [], []>} : vector<16x128xbf16>, vector<128x128xbf16>, vector<16x128xf32> -> vector<16x128xf32>
    %59 = arith.addf %56, %58 : vector<16x128xf32>
    %60 = arith.truncf %54 : vector<16x128xf32> to vector<16x128xbf16>
    %c0_35 = arith.constant 0 : index
    %c0_36 = arith.constant 0 : index
    %61 = vector.load %arg14[%c0_35, %c0_36] : memref<128x128xbf16, #tpu.memory_space<vmem>>, vector<128x128xbf16>
    %cst_37 = arith.constant dense<0.000000e+00> : vector<16x128xf32>
    %62 = tpu.matmul %60, %61, %cst_37 {dimension_numbers = #tpu.dot_dimension_numbers<[1], [0], [0], [1], [0, 0, 1, 1], [], []>} : vector<16x128xbf16>, vector<128x128xbf16>, vector<16x128xf32> -> vector<16x128xf32>
    %63 = arith.addf %59, %62 : vector<16x128xf32>
    %c0_38 = arith.constant 0 : index
    %c0_39 = arith.constant 0 : index
    %64 = vector.load %arg15[%c0_38, %c0_39] : memref<1x128xf32, #tpu.memory_space<vmem>>, vector<1x128xf32>
    %65 = vector.broadcast %64 : vector<1x128xf32> to vector<16x128xf32>
    %66 = arith.addf %63, %65 : vector<16x128xf32>
    %67 = vector.shape_cast %66 : vector<16x128xf32> to vector<2x8x128xf32>
    %c0_40 = arith.constant 0 : index
    %c0_41 = arith.constant 0 : index
    %c0_42 = arith.constant 0 : index
    %68 = vector.load %arg16[%c0_40, %c0_41, %c0_42] : memref<2x8x128xf32, #tpu.memory_space<vmem>>, vector<2x8x128xf32>
    tpu.vector_store %arg16[%c0_40, %c0_41, %c0_42], %67 {strides = array<i32>} : memref<2x8x128xf32, #tpu.memory_space<vmem>>, vector<2x8x128xf32>,
    return
  }
  func.func @transform_0(%arg0: i32) -> (i32, i32, i32) {
    %c0_i32 = arith.constant 0 : i32
    %c0_i32_0 = arith.constant 0 : i32
    %c0_i32_1 = arith.constant 0 : i32
    return %arg0, %c0_i32, %c0_i32_0 : i32, i32, i32
  }
  func.func @transform_1(%arg0: i32) -> (i32, i32, i32) {
    %c0_i32 = arith.constant 0 : i32
    %c0_i32_0 = arith.constant 0 : i32
    %c0_i32_1 = arith.constant 0 : i32
    return %arg0, %c0_i32, %c0_i32_0 : i32, i32, i32
  }
  func.func @transform_2(%arg0: i32) -> (i32, i32, i32) {
    %c0_i32 = arith.constant 0 : i32
    %c0_i32_0 = arith.constant 0 : i32
    %c0_i32_1 = arith.constant 0 : i32
    return %arg0, %c0_i32, %c0_i32_0 : i32, i32, i32
  }
  func.func @transform_3(%arg0: i32) -> (i32, i32, i32) {
    %c0_i32 = arith.constant 0 : i32
    %c0_i32_0 = arith.constant 0 : i32
    %c0_i32_1 = arith.constant 0 : i32
    return %arg0, %c0_i32, %c0_i32_0 : i32, i32, i32
  }
  func.func @transform_4(%arg0: i32) -> (i32, i32) {
    %c0_i32 = arith.constant 0 : i32
    %c0_i32_0 = arith.constant 0 : i32
    %c0_i32_1 = arith.constant 0 : i32
    return %c0_i32, %c0_i32_0 : i32, i32
  }
  func.func @transform_5(%arg0: i32) -> (i32, i32) {
    %c0_i32 = arith.constant 0 : i32
    %c0_i32_0 = arith.constant 0 : i32
    %c0_i32_1 = arith.constant 0 : i32
    return %c0_i32, %c0_i32_0 : i32, i32
  }
  func.func @transform_6(%arg0: i32) -> (i32, i32) {
    %c0_i32 = arith.constant 0 : i32
    %c0_i32_0 = arith.constant 0 : i32
    %c0_i32_1 = arith.constant 0 : i32
    return %c0_i32, %c0_i32_0 : i32, i32
  }
  func.func @transform_7(%arg0: i32) -> (i32, i32) {
    %c0_i32 = arith.constant 0 : i32
    %c0_i32_0 = arith.constant 0 : i32
    %c0_i32_1 = arith.constant 0 : i32
    return %c0_i32, %c0_i32_0 : i32, i32
  }
  func.func @transform_8(%arg0: i32) -> (i32, i32) {
    %c0_i32 = arith.constant 0 : i32
    %c0_i32_0 = arith.constant 0 : i32
    %c0_i32_1 = arith.constant 0 : i32
    return %c0_i32, %c0_i32_0 : i32, i32
  }
  func.func @transform_9(%arg0: i32) -> (i32, i32) {
    %c0_i32 = arith.constant 0 : i32
    %c0_i32_0 = arith.constant 0 : i32
    %c0_i32_1 = arith.constant 0 : i32
    return %c0_i32, %c0_i32_0 : i32, i32
  }
  func.func @transform_10(%arg0: i32) -> (i32, i32) {
    %c0_i32 = arith.constant 0 : i32
    %c0_i32_0 = arith.constant 0 : i32
    %c0_i32_1 = arith.constant 0 : i32
    return %c0_i32, %c0_i32_0 : i32, i32
  }
  func.func @transform_11(%arg0: i32) -> (i32, i32) {
    %c0_i32 = arith.constant 0 : i32
    %c0_i32_0 = arith.constant 0 : i32
    %c0_i32_1 = arith.constant 0 : i32
    return %c0_i32, %c0_i32_0 : i32, i32
  }
  func.func @transform_12(%arg0: i32) -> (i32, i32) {
    %c0_i32 = arith.constant 0 : i32
    %c0_i32_0 = arith.constant 0 : i32
    %c0_i32_1 = arith.constant 0 : i32
    return %c0_i32, %c0_i32_0 : i32, i32
  }
  func.func @transform_13(%arg0: i32) -> (i32, i32) {
    %c0_i32 = arith.constant 0 : i32
    %c0_i32_0 = arith.constant 0 : i32
    %c0_i32_1 = arith.constant 0 : i32
    return %c0_i32, %c0_i32_0 : i32, i32
  }
  func.func @transform_14(%arg0: i32) -> (i32, i32) {
    %c0_i32 = arith.constant 0 : i32
    %c0_i32_0 = arith.constant 0 : i32
    %c0_i32_1 = arith.constant 0 : i32
    return %c0_i32, %c0_i32_0 : i32, i32
  }
  func.func @transform_15(%arg0: i32) -> (i32, i32, i32) {
    %c0_i32 = arith.constant 0 : i32
    %c0_i32_0 = arith.constant 0 : i32
    %c0_i32_1 = arith.constant 0 : i32
    return %arg0, %c0_i32, %c0_i32_0 : i32, i32, i32
  }
}

</mosaic_0001>

<llo_original>
// kernel: sage_convolutions_forward.3
$region0: #{sage_convolutions_forward.3}
  #allocation0 [shape = 'u32[]', space=smem, size = 0x4, offset = 0x4, fixed_abs, tag = 'smem constant byte address 0x4 - core index']
  #allocation1 [shape = 'u32[72,128]{1,0:T(1,128)}', space=vmem, size = 0x9000, scoped, tag = 'internal scratch']
  %s0 = inlined_call_operand.vmem [shape: f32[2,8,4], index: 0, kind: input, shape index: {}]
  %s1 = inlined_call_operand.vmem [shape: bf16[2,8,8], index: 1, kind: input, shape index: {}]
  %s2 = inlined_call_operand.vmem [shape: bf16[4,128], index: 2, kind: input, shape index: {}]
  %s3 = inlined_call_operand.vmem [shape: bf16[4,128], index: 3, kind: input, shape index: {}]
  %s4 = inlined_call_operand.vmem [shape: f32[1,128], index: 4, kind: input, shape index: {}]
  %s5 = inlined_call_operand.vmem [shape: bf16[2,8,128], index: 5, kind: output, shape index: {0}]
  %s6 = inlined_call_operand.vmem [shape: f32[2,8,1], index: 6, kind: output, shape index: {1}]
  %s7 = inlined_call_operand.vmem [shape: f32[1,2,128], index: 7, kind: output, shape index: {2}]
  %8 = xla_tuple %s5, %s6, %s7
  %s9 = sld [smem:[#allocation0]]
  $region46: #{sage_convolutions_forward.3} parent=0
    _
  %s11 = ssub.s32 1, %s9
  %s12 = scalar_select 0, %s11, %s9
  // Predicated region
  $region2: #{sage_convolutions_forward.3} parent=0 // pred_check
    _
  $region3: #{sage_convolutions_forward.3} parent=0 // pred_check_branch
    %14 = sbr.rel (0) target = $region5
  $region4: #{sage_convolutions_forward.3} parent=0 // pred_region
    _
  $region5: #{sage_convolutions_forward.3} parent=0 // pred_fallthru
    _
  // Predicated region
  $region6: #{sage_convolutions_forward.3} parent=0 // pred_check
    _
  $region7: #{sage_convolutions_forward.3} parent=0 // pred_check_branch
    %16 = sbr.rel (0) target = $region9
  $region8: #{sage_convolutions_forward.3} parent=0 // pred_region
    _
  $region9: #{sage_convolutions_forward.3} parent=0 // pred_fallthru
    _
  // Predicated region
  $region10: #{sage_convolutions_forward.3} parent=0 // pred_check
    _
  $region11: #{sage_convolutions_forward.3} parent=0 // pred_check_branch
    %18 = sbr.rel (0) target = $region13
  $region12: #{sage_convolutions_forward.3} parent=0 // pred_region
    _
  $region13: #{sage_convolutions_forward.3} parent=0 // pred_fallthru
    _
  // Predicated region
  $region14: #{sage_convolutions_forward.3} parent=0 // pred_check
    _
  $region15: #{sage_convolutions_forward.3} parent=0 // pred_check_branch
    %20 = sbr.rel (0) target = $region17
  $region16: #{sage_convolutions_forward.3} parent=0 // pred_region
    _
  $region17: #{sage_convolutions_forward.3} parent=0 // pred_fallthru
    _
  // Predicated region
  $region18: #{sage_convolutions_forward.3} parent=0 // pred_check
    _
  $region19: #{sage_convolutions_forward.3} parent=0 // pred_check_branch
    %22 = sbr.rel (0) target = $region21
  $region20: #{sage_convolutions_forward.3} parent=0 // pred_region
    _
  $region21: #{sage_convolutions_forward.3} parent=0 // pred_fallthru
    _
  %v24 = vld [vmem:[%s0] sm:$0xff]
  %v25 = vld [vmem:[%s0 + $0x8] sm:$0xff]
  %v26 = vld [vmem:[%s1] sm:$0xf]
  %v27 = vld [vmem:[%s1 + $0x4] sm:$0xf]
  %v28 = vunpack.c.l.bf16 %v26
  %v29 = vunpack.c.l.bf16 %v27
  %vm30 = vcmask 64512
  %v31 = vsel %vm30, %v28, 0.0
  %32 = vadd.xlane.f32.xlu0 %v31
  %v33 = vpop.xlane.xlu0 %32
  %v34 = vsel %vm30, %v29, 0.0
  %35 = vadd.xlane.f32.xlu0 %v34
  %v36 = vpop.xlane.xlu0 %35
  %v37 = vmax.f32 %v33, 1.0
  %v38 = vmax.f32 %v36, 1.0
  %v39 = vrcp.pop %v37
  %v40 = vmul.f32 %v37, %v39
  %v41 = vsub.f32 1.0, %v40
  %v42 = vmul.f32 %v39, %v41
  %v43 = vadd.f32 %v39, %v42
  %vm44 = vweird.f32 %v37
  %vm45 = vweird.f32 %v39
  %vm46 = vmor %vm44, %vm45
  %v47 = vsel %vm46, %v39, %v43
  %v48 = vand.u32 2147483647, %v37
  %vm49 = vcmp.eq.f32.partialorder %v48, 8.507059e+37
  %v50 = vand.u32 %v37, 2147483648
  %v51 = vor.u32 1.1754944e-38, %v50
  %v52 = vsel %vm49, %v51, %v47
  %v53 = vrcp.pop %v38
  %v54 = vmul.f32 %v38, %v53
  %v55 = vsub.f32 1.0, %v54
  %v56 = vmul.f32 %v53, %v55
  %v57 = vadd.f32 %v53, %v56
  %vm58 = vweird.f32 %v38
  %vm59 = vweird.f32 %v53
  %vm60 = vmor %vm58, %vm59
  %v61 = vsel %vm60, %v53, %v57
  %v62 = vand.u32 2147483647, %v38
  %vm63 = vcmp.eq.f32.partialorder %v62, 8.507059e+37
  %v64 = vand.u32 %v38, 2147483648
  %v65 = vor.u32 1.1754944e-38, %v64
  %v66 = vsel %vm63, %v65, %v61
  %v67 = vpack.c.bf16 %v24, %v24
  %v68 = vpack.c.bf16 %v25, %v25
  %v70 = vsel %vm30, %v26, 0
  %vm72 = vcmask 1043456
  %v74 = vsel %vm72, %v67, 0
  %76 = vmatpush.bf16.msra.mxu0 0
  %77 = vmatpush.bf16.msra.mxu0 0
  %78 = vmatpush.bf16.msra.mxu0 0
  %79 = vmatpush.bf16.msra.mxu0 0
  %80 = vmatpush.bf16.msra.mxu0 0
  %81 = vmatpush.bf16.msra.mxu0 0
  %82 = vmatpush.bf16.msra.mxu0 0
  %83 = vmatpush.bf16.msra.mxu0 %v74
  %84 = vmatmul.bf16.gmra.mxu0 %v70
  %v85 = vpop.f32.mrf.mxu0
  %v86 = vadd.f32 0.0, %v85
  %v87 = vpop.f32.mrf.mxu0
  %88 = vdwg.mxu0
  %v90 = vsel %vm30, %v27, 0
  %v93 = vsel %vm72, %v68, 0
  %95 = vmatpush.bf16.msra.mxu0 0
  %96 = vmatpush.bf16.msra.mxu0 0
  %97 = vmatpush.bf16.msra.mxu0 0
  %98 = vmatpush.bf16.msra.mxu0 0
  %99 = vmatpush.bf16.msra.mxu0 0
  %100 = vmatpush.bf16.msra.mxu0 0
  %101 = vmatpush.bf16.msra.mxu0 0
  %102 = vmatpush.bf16.msra.mxu0 %v93
  %103 = vmatmul.bf16.gmra.mxu0 %v90
  %v104 = vpop.f32.mrf.mxu0
  %v105 = vadd.f32 0.0, %v104
  %v106 = vpop.f32.mrf.mxu0
  %107 = vdwg.mxu0
  %v108 = vmul.f32 %v86, %v52
  %v109 = vmul.f32 %v105, %v66
  %v110 = vpack.c.bf16 %v109, %v108
  %v111 = vld [vmem:[%s2] sm:$0x3]
  %v112 = vpack.c.bf16 %v25, %v24
  %v113 = vld [vmem:[%s3] sm:$0x3]
  %vm114 = vcmask 31744
  %v116 = vsel %vm114, %v112, 0
  %vm118 = vcmask 1041408
  %v120 = vsel %vm118, %v113, 0
  %122 = vmatpush.bf16.msra.mxu0 0
  %123 = vmatpush.bf16.msra.mxu0 0
  %124 = vmatpush.bf16.msra.mxu0 0
  %125 = vmatpush.bf16.msra.mxu0 0
  %126 = vmatpush.bf16.msra.mxu0 0
  %127 = vmatpush.bf16.msra.mxu0 0
  %128 = vmatpush.bf16.msra.mxu0 0
  %129 = vmatpush.bf16.msra.mxu0 %v120
  %130 = vmatmul.bf16.gmra.mxu0 %v116
  %v131 = vpop.f32.mrf.mxu0
  %v132 = vadd.f32 0.0, %v131
  %v133 = vpop.f32.mrf.mxu0
  %v134 = vadd.f32 0.0, %v133
  %135 = vdwg.mxu0
  %v137 = vsel %vm114, %v110, 0
  %v140 = vsel %vm118, %v111, 0
  %142 = vmatpush.bf16.msra.mxu0 0
  %143 = vmatpush.bf16.msra.mxu0 0
  %144 = vmatpush.bf16.msra.mxu0 0
  %145 = vmatpush.bf16.msra.mxu0 0
  %146 = vmatpush.bf16.msra.mxu0 0
  %147 = vmatpush.bf16.msra.mxu0 0
  %148 = vmatpush.bf16.msra.mxu0 0
  %149 = vmatpush.bf16.msra.mxu0 %v140
  %150 = vmatmul.bf16.gmra.mxu0 %v137
  %v151 = vpop.f32.mrf.mxu0
  %v152 = vadd.f32 %v132, %v151
  %v153 = vpop.f32.mrf.mxu0
  %v154 = vadd.f32 %v134, %v153
  %155 = vdwg.mxu0
  %v156 = vld [vmem:[%s4] sm:$0x1]
  %v158 = vperm.slane %v156, 0
  %v160 = vadd.f32 %v152, %v158
  %v161 = vadd.f32 %v154, %v158
  %v162 = vmul.f32 %v160, %v160
  %v163 = vmul.f32 %v161, %v161
  %164 = vadd.xlane.f32.xlu0 %v162
  %v165 = vpop.xlane.xlu0 %164
  %166 = vadd.xlane.f32.xlu0 %v163
  %v167 = vpop.xlane.xlu0 %166
  %v168 = vmax.f32 %v165, 1e-24
  %v169 = vmax.f32 %v167, 1e-24
  %v170 = vrsqrt.pop %v168
  %v171 = vmul.f32 %v170, %v168
  %v172 = vmul.f32 %v171, %v170
  %v173 = vmul.f32 0.5, %v172
  %v174 = vsub.f32 1.5, %v173
  %v175 = vmul.f32 %v170, %v174
  %vm176 = vweird.f32 %v168
  %vm177 = vweird.f32 %v170
  %vm178 = vmor %vm176, %vm177
  %v179 = vsel %vm178, %v170, %v175
  %v180 = vrsqrt.pop %v169
  %v181 = vmul.f32 %v180, %v169
  %v182 = vmul.f32 %v181, %v180
  %v183 = vmul.f32 0.5, %v182
  %v184 = vsub.f32 1.5, %v183
  %v185 = vmul.f32 %v180, %v184
  %vm186 = vweird.f32 %v169
  %vm187 = vweird.f32 %v180
  %vm188 = vmor %vm186, %vm187
  %v189 = vsel %vm188, %v180, %v185
  %v190 = vmul.f32 %v160, %v179
  %v191 = vmul.f32 %v161, %v189
  %v192 = vmax.f32 %v190, 0.0
  %v193 = vmax.f32 %v191, 0.0
  %v194 = vpack.c.bf16 %v192, %v192
  %v195 = vpack.c.bf16 %v193, %v193
  %196 = vst [vmem:[%s5] sm:$0xf] %v194
  %197 = vst [vmem:[%s5 + $0x4] sm:$0xf] %v195
  %vm198 = vcmask 7168
  %199 = vst.msk [vmem:[%s6] sm:$0xff] %vm198, %v33
  %200 = vst.msk [vmem:[%s6 + $0x8] sm:$0xff] %vm198, %v36
  %v201 = vadd.f32 %v192, %v193
  %v202 = vrot.slane %v201, 4
  %v203 = vadd.f32 %v201, %v202
  %v204 = vrot.slane %v203, 2
  %v205 = vadd.f32 %v203, %v204
  %v206 = vrot.slane %v205, 1
  %v207 = vadd.f32 %v205, %v206
  %v208 = vmul.f32 %v192, %v192
  %v209 = vmul.f32 %v193, %v193
  %v210 = vadd.f32 %v208, %v209
  %v211 = vrot.slane %v210, 4
  %v212 = vadd.f32 %v210, %v211
  %v213 = vrot.slane %v212, 2
  %v214 = vadd.f32 %v212, %v213
  %v215 = vrot.slane %v214, 1
  %v216 = vadd.f32 %v214, %v215
  %vm217 = vcmask 1040384
  %v218 = vsel %vm217, %v207, %v216
  %219 = vst [vmem:[%s7] sm:$0x3] %v218
  // Predicated region
  $region22: #{sage_convolutions_forward.3} parent=0 // pred_check
    _
  $region23: #{sage_convolutions_forward.3} parent=0 // pred_check_branch
    %221 = sbr.rel (0) target = $region25
  $region24: #{sage_convolutions_forward.3} parent=0 // pred_region
    _
  $region25: #{sage_convolutions_forward.3} parent=0 // pred_fallthru
    _
  // Predicated region
  $region26: #{sage_convolutions_forward.3} parent=0 // pred_check
    _
  $region27: #{sage_convolutions_forward.3} parent=0 // pred_check_branch
    %223 = sbr.rel (0) target = $region29
  $region28: #{sage_convolutions_forward.3} parent=0 // pred_region
    _
  $region29: #{sage_convolutions_forward.3} parent=0 // pred_fallthru
    _
  // Predicated region
  $region30: #{sage_convolutions_forward.3} parent=0 // pred_check
    _
  $region31: #{sage_convolutions_forward.3} parent=0 // pred_check_branch
    %225 = sbr.rel (0) target = $region33
  $region32: #{sage_convolutions_forward.3} parent=0 // pred_region
    _
  $region33: #{sage_convolutions_forward.3} parent=0 // pred_fallthru
    _
  // Predicated region
  $region34: #{sage_convolutions_forward.3} parent=0 // pred_check
    _
  $region35: #{sage_convolutions_forward.3} parent=0 // pred_check_branch
    %227 = sbr.rel (0) target = $region37
  $region36: #{sage_convolutions_forward.3} parent=0 // pred_region
    _
  $region37: #{sage_convolutions_forward.3} parent=0 // pred_fallthru
    _
  // Predicated region
  $region38: #{sage_convolutions_forward.3} parent=0 // pred_check
    _
  $region39: #{sage_convolutions_forward.3} parent=0 // pred_check_branch
    %229 = sbr.rel (0) target = $region41
  $region40: #{sage_convolutions_forward.3} parent=0 // pred_region
    _
  $region41: #{sage_convolutions_forward.3} parent=0 // pred_fallthru
    _
  // Predicated region
  $region42: #{sage_convolutions_forward.3} parent=0 // pred_check
    _
  $region43: #{sage_convolutions_forward.3} parent=0 // pred_check_branch
    %231 = sbr.rel (0) target = $region45
  $region44: #{sage_convolutions_forward.3} parent=0 // pred_region
    _
  $region45: #{sage_convolutions_forward.3} parent=0 // pred_fallthru
    _

// kernel: sage_convolutions_forward.4
$region0: #{sage_convolutions_forward.4}
  #allocation0 [shape = 'u32[]', space=smem, size = 0x4, offset = 0x4, fixed_abs, tag = 'smem constant byte address 0x4 - core index']
  #allocation1 [shape = 'u32[72,128]{1,0:T(1,128)}', space=vmem, size = 0x9000, scoped, tag = 'internal scratch']
  %s0 = inlined_call_operand.vmem [shape: bf16[2,8,128], index: 0, kind: input, shape index: {}]
  %s1 = inlined_call_operand.vmem [shape: bf16[2,8,8], index: 1, kind: input, shape index: {}]
  %s2 = inlined_call_operand.vmem [shape: f32[2,8,1], index: 2, kind: input, shape index: {}]
  %s3 = inlined_call_operand.vmem [shape: f32[1,128], index: 3, kind: input, shape index: {}]
  %s4 = inlined_call_operand.vmem [shape: f32[1,128], index: 4, kind: input, shape index: {}]
  %s5 = inlined_call_operand.vmem [shape: bf16[128,128], index: 5, kind: input, shape index: {}]
  %s6 = inlined_call_operand.vmem [shape: bf16[128,128], index: 6, kind: input, shape index: {}]
  %s7 = inlined_call_operand.vmem [shape: f32[1,128], index: 7, kind: input, shape index: {}]
  %s8 = inlined_call_operand.vmem [shape: bf16[2,8,128], index: 8, kind: output, shape index: {0}]
  %s9 = inlined_call_operand.vmem [shape: f32[2,8,128], index: 9, kind: output, shape index: {1}]
  %s10 = inlined_call_operand.vmem [shape: f32[1,2,128], index: 10, kind: output, shape index: {2}]
  %11 = xla_tuple %s8, %s9, %s10
  %s12 = sld [smem:[#allocation0]]
  $region58: #{sage_convolutions_forward.4} parent=0
    _
  %s14 = ssub.s32 1, %s12
  %s15 = scalar_select 0, %s14, %s12
  // Predicated region
  $region2: #{sage_convolutions_forward.4} parent=0 // pred_check
    _
  $region3: #{sage_convolutions_forward.4} parent=0 // pred_check_branch
    %17 = sbr.rel (0) target = $region5
  $region4: #{sage_convolutions_forward.4} parent=0 // pred_region
    _
  $region5: #{sage_convolutions_forward.4} parent=0 // pred_fallthru
    _
  // Predicated region
  $region6: #{sage_convolutions_forward.4} parent=0 // pred_check
    _
  $region7: #{sage_convolutions_forward.4} parent=0 // pred_check_branch
    %19 = sbr.rel (0) target = $region9
  $region8: #{sage_convolutions_forward.4} parent=0 // pred_region
    _
  $region9: #{sage_convolutions_forward.4} parent=0 // pred_fallthru
    _
  // Predicated region
  $region10: #{sage_convolutions_forward.4} parent=0 // pred_check
    _
  $region11: #{sage_convolutions_forward.4} parent=0 // pred_check_branch
    %21 = sbr.rel (0) target = $region13
  $region12: #{sage_convolutions_forward.4} parent=0 // pred_region
    _
  $region13: #{sage_convolutions_forward.4} parent=0 // pred_fallthru
    _
  // Predicated region
  $region14: #{sage_convolutions_forward.4} parent=0 // pred_check
    _
  $region15: #{sage_convolutions_forward.4} parent=0 // pred_check_branch
    %23 = sbr.rel (0) target = $region17
  $region16: #{sage_convolutions_forward.4} parent=0 // pred_region
    _
  $region17: #{sage_convolutions_forward.4} parent=0 // pred_fallthru
    _
  // Predicated region
  $region18: #{sage_convolutions_forward.4} parent=0 // pred_check
    _
  $region19: #{sage_convolutions_forward.4} parent=0 // pred_check_branch
    %25 = sbr.rel (0) target = $region21
  $region20: #{sage_convolutions_forward.4} parent=0 // pred_region
    _
  $region21: #{sage_convolutions_forward.4} parent=0 // pred_fallthru
    _
  // Predicated region
  $region22: #{sage_convolutions_forward.4} parent=0 // pred_check
    _
  $region23: #{sage_convolutions_forward.4} parent=0 // pred_check_branch
    %27 = sbr.rel (0) target = $region25
  $region24: #{sage_convolutions_forward.4} parent=0 // pred_region
    _
  $region25: #{sage_convolutions_forward.4} parent=0 // pred_fallthru
    _
  // Predicated region
  $region26: #{sage_convolutions_forward.4} parent=0 // pred_check
    _
  $region27: #{sage_convolutions_forward.4} parent=0 // pred_check_branch
    %29 = sbr.rel (0) target = $region29
  $region28: #{sage_convolutions_forward.4} parent=0 // pred_region
    _
  $region29: #{sage_convolutions_forward.4} parent=0 // pred_fallthru
    _
  // Predicated region
  $region30: #{sage_convolutions_forward.4} parent=0 // pred_check
    _
  $region31: #{sage_convolutions_forward.4} parent=0 // pred_check_branch
    %31 = sbr.rel (0) target = $region33
  $region32: #{sage_convolutions_forward.4} parent=0 // pred_region
    _
  $region33: #{sage_convolutions_forward.4} parent=0 // pred_fallthru
    _
  %v33 = vld [vmem:[%s0] sm:$0xf]
  %v34 = vld [vmem:[%s0 + $0x4] sm:$0xf]
  %v35 = vunpack.c.l.bf16 %v33
  %v36 = vunpack.c.l.bf16 %v34
  %v37 = vld [vmem:[%s3] sm:$0x1]
  %v39 = vperm.slane %v37, 0
  %v41 = vmul.f32 %v35, %v39
  %v42 = vmul.f32 %v36, %v39
  %v43 = vld [vmem:[%s4] sm:$0x1]
  %v45 = vperm.slane %v43, 0
  %v47 = vadd.f32 %v41, %v45
  %v48 = vadd.f32 %v42, %v45
  %v49 = vld [vmem:[%s1] sm:$0xf]
  %v50 = vld [vmem:[%s1 + $0x4] sm:$0xf]
  %v51 = vld [vmem:[%s2] sm:$0xff]
  %v52 = vld [vmem:[%s2 + $0x8] sm:$0xff]
  %v53 = vmax.f32 %v51, 1.0
  %v54 = vmax.f32 %v52, 1.0
  %v55 = vrcp.pop %v53
  %v56 = vmul.f32 %v53, %v55
  %v57 = vsub.f32 1.0, %v56
  %v58 = vmul.f32 %v55, %v57
  %v59 = vadd.f32 %v55, %v58
  %vm60 = vweird.f32 %v53
  %vm61 = vweird.f32 %v55
  %vm62 = vmor %vm60, %vm61
  %v63 = vsel %vm62, %v55, %v59
  %v64 = vand.u32 2147483647, %v53
  %vm65 = vcmp.eq.f32.partialorder %v64, 8.507059e+37
  %v66 = vand.u32 %v53, 2147483648
  %v67 = vor.u32 1.1754944e-38, %v66
  %v68 = vsel %vm65, %v67, %v63
  %v69 = vrcp.pop %v54
  %v70 = vmul.f32 %v54, %v69
  %v71 = vsub.f32 1.0, %v70
  %v72 = vmul.f32 %v69, %v71
  %v73 = vadd.f32 %v69, %v72
  %vm74 = vweird.f32 %v54
  %vm75 = vweird.f32 %v69
  %vm76 = vmor %vm74, %vm75
  %v77 = vsel %vm76, %v69, %v73
  %v78 = vand.u32 2147483647, %v54
  %vm79 = vcmp.eq.f32.partialorder %v78, 8.507059e+37
  %v80 = vand.u32 %v54, 2147483648
  %v81 = vor.u32 1.1754944e-38, %v80
  %v82 = vsel %vm79, %v81, %v77
  %v83 = vpack.c.bf16 %v47, %v47
  %v84 = vpack.c.bf16 %v48, %v48
  %vm85 = vcmask 64512
  %v87 = vsel %vm85, %v49, 0
  %vm89 = vcmask 1043456
  %v91 = vsel %vm89, %v83, 0
  %93 = vmatpush.bf16.msra.mxu0 0
  %94 = vmatpush.bf16.msra.mxu0 0
  %95 = vmatpush.bf16.msra.mxu0 0
  %96 = vmatpush.bf16.msra.mxu0 0
  %97 = vmatpush.bf16.msra.mxu0 0
  %98 = vmatpush.bf16.msra.mxu0 0
  %99 = vmatpush.bf16.msra.mxu0 0
  %100 = vmatpush.bf16.msra.mxu0 %v91
  %101 = vmatmul.bf16.gmra.mxu0 %v87
  %v102 = vpop.f32.mrf.mxu0
  %v103 = vadd.f32 0.0, %v102
  %v104 = vpop.f32.mrf.mxu0
  %105 = vdwg.mxu0
  %v107 = vsel %vm85, %v50, 0
  %v110 = vsel %vm89, %v84, 0
  %112 = vmatpush.bf16.msra.mxu0 0
  %113 = vmatpush.bf16.msra.mxu0 0
  %114 = vmatpush.bf16.msra.mxu0 0
  %115 = vmatpush.bf16.msra.mxu0 0
  %116 = vmatpush.bf16.msra.mxu0 0
  %117 = vmatpush.bf16.msra.mxu0 0
  %118 = vmatpush.bf16.msra.mxu0 0
  %119 = vmatpush.bf16.msra.mxu0 %v110
  %120 = vmatmul.bf16.gmra.mxu0 %v107
  %v121 = vpop.f32.mrf.mxu0
  %v122 = vadd.f32 0.0, %v121
  %v123 = vpop.f32.mrf.mxu0
  %124 = vdwg.mxu0
  %126 = vset.pattern.permute.xlu0 0
  %127 = vperm.xlu0 %126, %v68
  %v128 = vpop.permute.xlu0 %127
  %131 = vset.pattern.permute.xlu0 0
  %132 = vperm.xlu0 %131, %v82
  %v133 = vpop.permute.xlu0 %132
  %v135 = vmul.f32 %v103, %v128
  %v136 = vmul.f32 %v122, %v133
  %v137 = vpack.c.bf16 %v136, %v135
  %v138 = vld [vmem:[%s5] sm:$0xf]
  %v139 = vld [vmem:[%s5 + $0x4] sm:$0xf]
  %v140 = vld [vmem:[%s5 + $0x8] sm:$0xf]
  %v141 = vld [vmem:[%s5 + $0xc] sm:$0xf]
  %v142 = vld [vmem:[%s5 + $0x10] sm:$0xf]
  %v143 = vld [vmem:[%s5 + $0x14] sm:$0xf]
  %v144 = vld [vmem:[%s5 + $0x18] sm:$0xf]
  %v145 = vld [vmem:[%s5 + $0x1c] sm:$0xf]
  %v146 = vld [vmem:[%s5 + $0x20] sm:$0xf]
  %v147 = vld [vmem:[%s5 + $0x24] sm:$0xf]
  %v148 = vld [vmem:[%s5 + $0x28] sm:$0xf]
  %v149 = vld [vmem:[%s5 + $0x2c] sm:$0xf]
  %v150 = vld [vmem:[%s5 + $0x30] sm:$0xf]
  %v151 = vld [vmem:[%s5 + $0x34] sm:$0xf]
  %v152 = vld [vmem:[%s5 + $0x38] sm:$0xf]
  %v153 = vld [vmem:[%s5 + $0x3c] sm:$0xf]
  %v154 = vpack.c.bf16 %v48, %v47
  %v155 = vld [vmem:[%s6] sm:$0xf]
  %v156 = vld [vmem:[%s6 + $0x4] sm:$0xf]
  %v157 = vld [vmem:[%s6 + $0x8] sm:$0xf]
  %v158 = vld [vmem:[%s6 + $0xc] sm:$0xf]
  %v159 = vld [vmem:[%s6 + $0x10] sm:$0xf]
  %v160 = vld [vmem:[%s6 + $0x14] sm:$0xf]
  %v161 = vld [vmem:[%s6 + $0x18] sm:$0xf]
  %v162 = vld [vmem:[%s6 + $0x1c] sm:$0xf]
  %v163 = vld [vmem:[%s6 + $0x20] sm:$0xf]
  %v164 = vld [vmem:[%s6 + $0x24] sm:$0xf]
  %v165 = vld [vmem:[%s6 + $0x28] sm:$0xf]
  %v166 = vld [vmem:[%s6 + $0x2c] sm:$0xf]
  %v167 = vld [vmem:[%s6 + $0x30] sm:$0xf]
  %v168 = vld [vmem:[%s6 + $0x34] sm:$0xf]
  %v169 = vld [vmem:[%s6 + $0x38] sm:$0xf]
  %v170 = vld [vmem:[%s6 + $0x3c] sm:$0xf]
  %v187 = vunpack.c.l.b16 %v155
  %v188 = vunpack.c.l.b16 %v156
  %v189 = vunpack.c.l.b16 %v157
  %v190 = vunpack.c.l.b16 %v158
  %v191 = vunpack.c.l.b16 %v159
  %v192 = vunpack.c.l.b16 %v160
  %v193 = vunpack.c.l.b16 %v161
  %v194 = vunpack.c.l.b16 %v162
  %v195 = vunpack.c.l.b16 %v163
  %v196 = vunpack.c.l.b16 %v164
  %v197 = vunpack.c.l.b16 %v165
  %v198 = vunpack.c.l.b16 %v166
  %v199 = vunpack.c.l.b16 %v167
  %v200 = vunpack.c.l.b16 %v168
  %v201 = vunpack.c.l.b16 %v169
  %v202 = vunpack.c.l.b16 %v170
  %v203 = vpack.c.b16 %v188, %v187
  %v204 = vpack.c.b16 %v190, %v189
  %v205 = vpack.c.b16 %v192, %v191
  %v206 = vpack.c.b16 %v194, %v193
  %v207 = vpack.c.b16 %v196, %v195
  %v208 = vpack.c.b16 %v198, %v197
  %v209 = vpack.c.b16 %v200, %v199
  %v210 = vpack.c.b16 %v202, %v201
  %219 = vmatpush.bf16.msra.mxu0 %v210
  %220 = vmatpush.bf16.msra.mxu0 %v209
  %221 = vmatpush.bf16.msra.mxu0 %v208
  %222 = vmatpush.bf16.msra.mxu0 %v207
  %223 = vmatpush.bf16.msra.mxu0 %v206
  %224 = vmatpush.bf16.msra.mxu0 %v205
  %225 = vmatpush.bf16.msra.mxu0 %v204
  %226 = vmatpush.bf16.msra.mxu0 %v203
  %227 = vmatmul.bf16.gmra.mxu0 %v154
  %v228 = vpop.f32.mrf.mxu0
  %v229 = vadd.f32 0.0, %v228
  %v230 = vpop.f32.mrf.mxu0
  %v231 = vadd.f32 0.0, %v230
  %232 = vdwg.mxu0
  %v249 = vunpack.c.l.b16 %v138
  %v250 = vunpack.c.l.b16 %v139
  %v251 = vunpack.c.l.b16 %v140
  %v252 = vunpack.c.l.b16 %v141
  %v253 = vunpack.c.l.b16 %v142
  %v254 = vunpack.c.l.b16 %v143
  %v255 = vunpack.c.l.b16 %v144
  %v256 = vunpack.c.l.b16 %v145
  %v257 = vunpack.c.l.b16 %v146
  %v258 = vunpack.c.l.b16 %v147
  %v259 = vunpack.c.l.b16 %v148
  %v260 = vunpack.c.l.b16 %v149
  %v261 = vunpack.c.l.b16 %v150
  %v262 = vunpack.c.l.b16 %v151
  %v263 = vunpack.c.l.b16 %v152
  %v264 = vunpack.c.l.b16 %v153
  %v265 = vpack.c.b16 %v250, %v249
  %v266 = vpack.c.b16 %v252, %v251
  %v267 = vpack.c.b16 %v254, %v253
  %v268 = vpack.c.b16 %v256, %v255
  %v269 = vpack.c.b16 %v258, %v257
  %v270 = vpack.c.b16 %v260, %v259
  %v271 = vpack.c.b16 %v262, %v261
  %v272 = vpack.c.b16 %v264, %v263
  %281 = vmatpush.bf16.msra.mxu0 %v272
  %282 = vmatpush.bf16.msra.mxu0 %v271
  %283 = vmatpush.bf16.msra.mxu0 %v270
  %284 = vmatpush.bf16.msra.mxu0 %v269
  %285 = vmatpush.bf16.msra.mxu0 %v268
  %286 = vmatpush.bf16.msra.mxu0 %v267
  %287 = vmatpush.bf16.msra.mxu0 %v266
  %288 = vmatpush.bf16.msra.mxu0 %v265
  %289 = vmatmul.bf16.gmra.mxu0 %v137
  %v290 = vpop.f32.mrf.mxu0
  %v291 = vadd.f32 %v229, %v290
  %v292 = vpop.f32.mrf.mxu0
  %v293 = vadd.f32 %v231, %v292
  %294 = vdwg.mxu0
  %v295 = vld [vmem:[%s7] sm:$0x1]
  %v297 = vperm.slane %v295, 0
  %v299 = vadd.f32 %v291, %v297
  %v300 = vadd.f32 %v293, %v297
  %v301 = vmul.f32 %v299, %v299
  %v302 = vmul.f32 %v300, %v300
  %303 = vadd.xlane.f32.xlu0 %v301
  %v304 = vpop.xlane.xlu0 %303
  %305 = vadd.xlane.f32.xlu0 %v302
  %v306 = vpop.xlane.xlu0 %305
  %v307 = vmax.f32 %v304, 1e-24
  %v308 = vmax.f32 %v306, 1e-24
  %v309 = vrsqrt.pop %v307
  %v310 = vmul.f32 %v309, %v307
  %v311 = vmul.f32 %v310, %v309
  %v312 = vmul.f32 0.5, %v311
  %v313 = vsub.f32 1.5, %v312
  %v314 = vmul.f32 %v309, %v313
  %vm315 = vweird.f32 %v307
  %vm316 = vweird.f32 %v309
  %vm317 = vmor %vm315, %vm316
  %v318 = vsel %vm317, %v309, %v314
  %v319 = vrsqrt.pop %v308
  %v320 = vmul.f32 %v319, %v308
  %v321 = vmul.f32 %v320, %v319
  %v322 = vmul.f32 0.5, %v321
  %v323 = vsub.f32 1.5, %v322
  %v324 = vmul.f32 %v319, %v323
  %vm325 = vweird.f32 %v308
  %vm326 = vweird.f32 %v319
  %vm327 = vmor %vm325, %vm326
  %v328 = vsel %vm327, %v319, %v324
  %v329 = vmul.f32 %v299, %v318
  %v330 = vmul.f32 %v300, %v328
  %v331 = vmax.f32 %v329, 0.0
  %v332 = vmax.f32 %v330, 0.0
  %v333 = vpack.c.bf16 %v331, %v331
  %v334 = vpack.c.bf16 %v332, %v332
  %335 = vst [vmem:[%s8] sm:$0xf] %v333
  %336 = vst [vmem:[%s8 + $0x4] sm:$0xf] %v334
  %v338 = vsel %vm89, %v333, 0
  %340 = vmatpush.bf16.msra.mxu0 0
  %341 = vmatpush.bf16.msra.mxu0 0
  %342 = vmatpush.bf16.msra.mxu0 0
  %343 = vmatpush.bf16.msra.mxu0 0
  %344 = vmatpush.bf16.msra.mxu0 0
  %345 = vmatpush.bf16.msra.mxu0 0
  %346 = vmatpush.bf16.msra.mxu0 0
  %347 = vmatpush.bf16.msra.mxu0 %v338
  %348 = vmatmul.bf16.gmra.mxu0 %v87
  %v349 = vpop.f32.mrf.mxu0
  %v350 = vadd.f32 0.0, %v349
  %v351 = vpop.f32.mrf.mxu0
  %352 = vdwg.mxu0
  %v354 = vsel %vm89, %v334, 0
  %356 = vmatpush.bf16.msra.mxu0 0
  %357 = vmatpush.bf16.msra.mxu0 0
  %358 = vmatpush.bf16.msra.mxu0 0
  %359 = vmatpush.bf16.msra.mxu0 0
  %360 = vmatpush.bf16.msra.mxu0 0
  %361 = vmatpush.bf16.msra.mxu0 0
  %362 = vmatpush.bf16.msra.mxu0 0
  %363 = vmatpush.bf16.msra.mxu0 %v354
  %364 = vmatmul.bf16.gmra.mxu0 %v107
  %v365 = vpop.f32.mrf.mxu0
  %v366 = vadd.f32 0.0, %v365
  %v367 = vpop.f32.mrf.mxu0
  %368 = vdwg.mxu0
  %369 = vst [vmem:[%s9] sm:$0xff] %v350
  %370 = vst [vmem:[%s9 + $0x8] sm:$0xff] %v366
  %v371 = vadd.f32 %v331, %v332
  %v372 = vrot.slane %v371, 4
  %v373 = vadd.f32 %v371, %v372
  %v374 = vrot.slane %v373, 2
  %v375 = vadd.f32 %v373, %v374
  %v376 = vrot.slane %v375, 1
  %v377 = vadd.f32 %v375, %v376
  %v378 = vmul.f32 %v331, %v331
  %v379 = vmul.f32 %v332, %v332
  %v380 = vadd.f32 %v378, %v379
  %v381 = vrot.slane %v380, 4
  %v382 = vadd.f32 %v380, %v381
  %v383 = vrot.slane %v382, 2
  %v384 = vadd.f32 %v382, %v383
  %v385 = vrot.slane %v384, 1
  %v386 = vadd.f32 %v384, %v385
  %vm387 = vcmask 1040384
  %v388 = vsel %vm387, %v377, %v386
  %389 = vst [vmem:[%s10] sm:$0x3] %v388
  // Predicated region
  $region34: #{sage_convolutions_forward.4} parent=0 // pred_check
    _
  $region35: #{sage_convolutions_forward.4} parent=0 // pred_check_branch
    %391 = sbr.rel (0) target = $region37
  $region36: #{sage_convolutions_forward.4} parent=0 // pred_region
    _
  $region37: #{sage_convolutions_forward.4} parent=0 // pred_fallthru
    _
  // Predicated region
  $region38: #{sage_convolutions_forward.4} parent=0 // pred_check
    _
  $region39: #{sage_convolutions_forward.4} parent=0 // pred_check_branch
    %393 = sbr.rel (0) target = $region41
  $region40: #{sage_convolutions_forward.4} parent=0 // pred_region
    _
  $region41: #{sage_convolutions_forward.4} parent=0 // pred_fallthru
    _
  // Predicated region
  $region42: #{sage_convolutions_forward.4} parent=0 // pred_check
    _
  $region43: #{sage_convolutions_forward.4} parent=0 // pred_check_branch
    %395 = sbr.rel (0) target = $region45
  $region44: #{sage_convolutions_forward.4} parent=0 // pred_region
    _
  $region45: #{sage_convolutions_forward.4} parent=0 // pred_fallthru
    _
  // Predicated region
  $region46: #{sage_convolutions_forward.4} parent=0 // pred_check
    _
  $region47: #{sage_convolutions_forward.4} parent=0 // pred_check_branch
    %397 = sbr.rel (0) target = $region49
  $region48: #{sage_convolutions_forward.4} parent=0 // pred_region
    _
  $region49: #{sage_convolutions_forward.4} parent=0 // pred_fallthru
    _
  // Predicated region
  $region50: #{sage_convolutions_forward.4} parent=0 // pred_check
    _
  $region51: #{sage_convolutions_forward.4} parent=0 // pred_check_branch
    %399 = sbr.rel (0) target = $region53
  $region52: #{sage_convolutions_forward.4} parent=0 // pred_region
    _
  $region53: #{sage_convolutions_forward.4} parent=0 // pred_fallthru
    _
  // Predicated region
  $region54: #{sage_convolutions_forward.4} parent=0 // pred_check
    _
  $region55: #{sage_convolutions_forward.4} parent=0 // pred_check_branch
    %401 = sbr.rel (0) target = $region57
  $region56: #{sage_convolutions_forward.4} parent=0 // pred_region
    _
  $region57: #{sage_convolutions_forward.4} parent=0 // pred_fallthru
    _

// kernel: sage_convolutions_forward.5
$region0: #{sage_convolutions_forward.5}
  #allocation0 [shape = 'u32[]', space=smem, size = 0x4, offset = 0x4, fixed_abs, tag = 'smem constant byte address 0x4 - core index']
  #allocation1 [shape = 'u32[72,128]{1,0:T(1,128)}', space=vmem, size = 0x9000, scoped, tag = 'internal scratch']
  %s0 = inlined_call_operand.vmem [shape: bf16[2,8,128], index: 0, kind: input, shape index: {}]
  %s1 = inlined_call_operand.vmem [shape: bf16[2,8,128], index: 1, kind: input, shape index: {}]
  %s2 = inlined_call_operand.vmem [shape: f32[2,8,128], index: 2, kind: input, shape index: {}]
  %s3 = inlined_call_operand.vmem [shape: f32[2,8,1], index: 3, kind: input, shape index: {}]
  %s4 = inlined_call_operand.vmem [shape: f32[1,128], index: 4, kind: input, shape index: {}]
  %s5 = inlined_call_operand.vmem [shape: f32[1,128], index: 5, kind: input, shape index: {}]
  %s6 = inlined_call_operand.vmem [shape: f32[1,128], index: 6, kind: input, shape index: {}]
  %s7 = inlined_call_operand.vmem [shape: f32[1,128], index: 7, kind: input, shape index: {}]
  %s8 = inlined_call_operand.vmem [shape: bf16[128,128], index: 8, kind: input, shape index: {}]
  %s9 = inlined_call_operand.vmem [shape: bf16[128,128], index: 9, kind: input, shape index: {}]
  %s10 = inlined_call_operand.vmem [shape: f32[1,128], index: 10, kind: input, shape index: {}]
  %s11 = inlined_call_operand.vmem [shape: bf16[128,128], index: 11, kind: input, shape index: {}]
  %s12 = inlined_call_operand.vmem [shape: bf16[128,128], index: 12, kind: input, shape index: {}]
  %s13 = inlined_call_operand.vmem [shape: bf16[128,128], index: 13, kind: input, shape index: {}]
  %s14 = inlined_call_operand.vmem [shape: f32[1,128], index: 14, kind: input, shape index: {}]
  %s15 = inlined_call_operand.hbm [shape: f32[2,8,128], index: 15, kind: output, shape index: {}]
  %s16 = sld [smem:[#allocation0]]
  $region70: #{sage_convolutions_forward.5} parent=0
    _
  %s18 = ssub.s32 1, %s16
  %s19 = scalar_select 0, %s18, %s16
  $region1: #{sage_convolutions_forward.5} parent=0
    #allocation2 [shape = 'u8[8192]{0}', space=vmem, size = 0x2000, scoped, tag = 'output window, operand 0, single buffered']
    #allocation3 [shape = 's32[1]{0}', space=sflag, size = 0x4, scoped, tag = 'scoped memory for sage_convolutions_forward.5']
    %20 = vsyncpa [#allocation3], 0
    // Predicated region
    $region2: #{sage_convolutions_forward.5} parent=1 // pred_check
      _
    $region3: #{sage_convolutions_forward.5} parent=1 // pred_check_branch
      %22 = sbr.rel (0) target = $region5
    $region4: #{sage_convolutions_forward.5} parent=1 // pred_region
      _
    $region5: #{sage_convolutions_forward.5} parent=1 // pred_fallthru
      _
    // Predicated region
    $region6: #{sage_convolutions_forward.5} parent=1 // pred_check
      _
    $region7: #{sage_convolutions_forward.5} parent=1 // pred_check_branch
      %24 = sbr.rel (0) target = $region9
    $region8: #{sage_convolutions_forward.5} parent=1 // pred_region
      _
    $region9: #{sage_convolutions_forward.5} parent=1 // pred_fallthru
      _
    // Predicated region
    $region10: #{sage_convolutions_forward.5} parent=1 // pred_check
      _
    $region11: #{sage_convolutions_forward.5} parent=1 // pred_check_branch
      %26 = sbr.rel (0) target = $region13
    $region12: #{sage_convolutions_forward.5} parent=1 // pred_region
      _
    $region13: #{sage_convolutions_forward.5} parent=1 // pred_fallthru
      _
    // Predicated region
    $region14: #{sage_convolutions_forward.5} parent=1 // pred_check
      _
    $region15: #{sage_convolutions_forward.5} parent=1 // pred_check_branch
      %28 = sbr.rel (0) target = $region17
    $region16: #{sage_convolutions_forward.5} parent=1 // pred_region
      _
    $region17: #{sage_convolutions_forward.5} parent=1 // pred_fallthru
      _
    // Predicated region
    $region18: #{sage_convolutions_forward.5} parent=1 // pred_check
      _
    $region19: #{sage_convolutions_forward.5} parent=1 // pred_check_branch
      %30 = sbr.rel (0) target = $region21
    $region20: #{sage_convolutions_forward.5} parent=1 // pred_region
      _
    $region21: #{sage_convolutions_forward.5} parent=1 // pred_fallthru
      _
    // Predicated region
    $region22: #{sage_convolutions_forward.5} parent=1 // pred_check
      _
    $region23: #{sage_convolutions_forward.5} parent=1 // pred_check_branch
      %32 = sbr.rel (0) target = $region25
    $region24: #{sage_convolutions_forward.5} parent=1 // pred_region
      _
    $region25: #{sage_convolutions_forward.5} parent=1 // pred_fallthru
      _
    // Predicated region
    $region26: #{sage_convolutions_forward.5} parent=1 // pred_check
      _
    $region27: #{sage_convolutions_forward.5} parent=1 // pred_check_branch
      %34 = sbr.rel (0) target = $region29
    $region28: #{sage_convolutions_forward.5} parent=1 // pred_region
      _
    $region29: #{sage_convolutions_forward.5} parent=1 // pred_fallthru
      _
    // Predicated region
    $region30: #{sage_convolutions_forward.5} parent=1 // pred_check
      _
    $region31: #{sage_convolutions_forward.5} parent=1 // pred_check_branch
      %36 = sbr.rel (0) target = $region33
    $region32: #{sage_convolutions_forward.5} parent=1 // pred_region
      _
    $region33: #{sage_convolutions_forward.5} parent=1 // pred_fallthru
      _
    // Predicated region
    $region34: #{sage_convolutions_forward.5} parent=1 // pred_check
      _
    $region35: #{sage_convolutions_forward.5} parent=1 // pred_check_branch
      %38 = sbr.rel (0) target = $region37
    $region36: #{sage_convolutions_forward.5} parent=1 // pred_region
      _
    $region37: #{sage_convolutions_forward.5} parent=1 // pred_fallthru
      _
    // Predicated region
    $region38: #{sage_convolutions_forward.5} parent=1 // pred_check
      _
    $region39: #{sage_convolutions_forward.5} parent=1 // pred_check_branch
      %40 = sbr.rel (0) target = $region41
    $region40: #{sage_convolutions_forward.5} parent=1 // pred_region
      _
    $region41: #{sage_convolutions_forward.5} parent=1 // pred_fallthru
      _
    // Predicated region
    $region42: #{sage_convolutions_forward.5} parent=1 // pred_check
      _
    $region43: #{sage_convolutions_forward.5} parent=1 // pred_check_branch
      %42 = sbr.rel (0) target = $region45
    $region44: #{sage_convolutions_forward.5} parent=1 // pred_region
      _
    $region45: #{sage_convolutions_forward.5} parent=1 // pred_fallthru
      _
    // Predicated region
    $region46: #{sage_convolutions_forward.5} parent=1 // pred_check
      _
    $region47: #{sage_convolutions_forward.5} parent=1 // pred_check_branch
      %44 = sbr.rel (0) target = $region49
    $region48: #{sage_convolutions_forward.5} parent=1 // pred_region
      _
    $region49: #{sage_convolutions_forward.5} parent=1 // pred_fallthru
      _
    // Predicated region
    $region50: #{sage_convolutions_forward.5} parent=1 // pred_check
      _
    $region51: #{sage_convolutions_forward.5} parent=1 // pred_check_branch
      %46 = sbr.rel (0) target = $region53
    $region52: #{sage_convolutions_forward.5} parent=1 // pred_region
      _
    $region53: #{sage_convolutions_forward.5} parent=1 // pred_fallthru
      _
    // Predicated region
    $region54: #{sage_convolutions_forward.5} parent=1 // pred_check
      _
    $region55: #{sage_convolutions_forward.5} parent=1 // pred_check_branch
      %48 = sbr.rel (0) target = $region57
    $region56: #{sage_convolutions_forward.5} parent=1 // pred_region
      _
    $region57: #{sage_convolutions_forward.5} parent=1 // pred_fallthru
      _
    // Predicated region
    $region58: #{sage_convolutions_forward.5} parent=1 // pred_check
      _
    $region59: #{sage_convolutions_forward.5} parent=1 // pred_check_branch
      %50 = sbr.rel (0) target = $region61
    $region60: #{sage_convolutions_forward.5} parent=1 // pred_region
      _
    $region61: #{sage_convolutions_forward.5} parent=1 // pred_fallthru
      _
    %v51 = vld [vmem:[%s4] sm:$0x1]
    %v52 = vld [vmem:[%s5] sm:$0x1]
    %v53 = vld [vmem:[%s6] sm:$0x1]
    %v54 = vld [vmem:[%s7] sm:$0x1]
    %v55 = vld [vmem:[%s0] sm:$0xf]
    %v56 = vld [vmem:[%s0 + $0x4] sm:$0xf]
    %v57 = vunpack.c.l.bf16 %v55
    %v58 = vunpack.c.l.bf16 %v56
    %v60 = vperm.slane %v51, 0
    %v62 = vmul.f32 %v57, %v60
    %v63 = vmul.f32 %v58, %v60
    %v65 = vperm.slane %v52, 0
    %v67 = vadd.f32 %v62, %v65
    %v68 = vadd.f32 %v63, %v65
    %v69 = vld [vmem:[%s1] sm:$0xf]
    %v70 = vld [vmem:[%s1 + $0x4] sm:$0xf]
    %v71 = vunpack.c.l.bf16 %v69
    %v72 = vunpack.c.l.bf16 %v70
    %v74 = vperm.slane %v53, 0
    %v76 = vmul.f32 %v71, %v74
    %v77 = vmul.f32 %v72, %v74
    %v79 = vperm.slane %v54, 0
    %v81 = vadd.f32 %v76, %v79
    %v82 = vadd.f32 %v77, %v79
    %v83 = vld [vmem:[%s3] sm:$0xff]
    %v84 = vld [vmem:[%s3 + $0x8] sm:$0xff]
    %v85 = vmax.f32 %v83, 1.0
    %v86 = vmax.f32 %v84, 1.0
    %v87 = vrcp.pop %v85
    %v88 = vmul.f32 %v85, %v87
    %v89 = vsub.f32 1.0, %v88
    %v90 = vmul.f32 %v87, %v89
    %v91 = vadd.f32 %v87, %v90
    %vm92 = vweird.f32 %v85
    %vm93 = vweird.f32 %v87
    %vm94 = vmor %vm92, %vm93
    %v95 = vsel %vm94, %v87, %v91
    %v96 = vand.u32 2147483647, %v85
    %vm97 = vcmp.eq.f32.partialorder %v96, 8.507059e+37
    %v98 = vand.u32 %v85, 2147483648
    %v99 = vor.u32 1.1754944e-38, %v98
    %v100 = vsel %vm97, %v99, %v95
    %v101 = vrcp.pop %v86
    %v102 = vmul.f32 %v86, %v101
    %v103 = vsub.f32 1.0, %v102
    %v104 = vmul.f32 %v101, %v103
    %v105 = vadd.f32 %v101, %v104
    %vm106 = vweird.f32 %v86
    %vm107 = vweird.f32 %v101
    %vm108 = vmor %vm106, %vm107
    %v109 = vsel %vm108, %v101, %v105
    %v110 = vand.u32 2147483647, %v86
    %vm111 = vcmp.eq.f32.partialorder %v110, 8.507059e+37
    %v112 = vand.u32 %v86, 2147483648
    %v113 = vor.u32 1.1754944e-38, %v112
    %v114 = vsel %vm111, %v113, %v109
    %v115 = vld [vmem:[%s2] sm:$0xff]
    %v116 = vld [vmem:[%s2 + $0x8] sm:$0xff]
    %v117 = vmul.f32 %v115, %v74
    %v118 = vmul.f32 %v116, %v74
    %120 = vset.pattern.permute.xlu0 0
    %121 = vperm.xlu0 %120, %v83
    %v122 = vpop.permute.xlu0 %121
    %125 = vset.pattern.permute.xlu0 0
    %126 = vperm.xlu0 %125, %v84
    %v127 = vpop.permute.xlu0 %126
    %v129 = vmul.f32 %v122, %v79
    %v130 = vmul.f32 %v127, %v79
    %v131 = vadd.f32 %v117, %v129
    %v132 = vadd.f32 %v118, %v130
    %134 = vset.pattern.permute.xlu0 0
    %135 = vperm.xlu0 %134, %v100
    %v136 = vpop.permute.xlu0 %135
    %139 = vset.pattern.permute.xlu0 0
    %140 = vperm.xlu0 %139, %v114
    %v141 = vpop.permute.xlu0 %140
    %v143 = vmul.f32 %v131, %v136
    %v144 = vmul.f32 %v132, %v141
    %v145 = vpack.c.bf16 %v68, %v67
    %v146 = vpack.c.bf16 %v82, %v81
    %v147 = vpack.c.bf16 %v144, %v143
    %v148 = vld [vmem:[%s8] sm:$0xf]
    %v149 = vld [vmem:[%s8 + $0x4] sm:$0xf]
    %v150 = vld [vmem:[%s8 + $0x8] sm:$0xf]
    %v151 = vld [vmem:[%s8 + $0xc] sm:$0xf]
    %v152 = vld [vmem:[%s8 + $0x10] sm:$0xf]
    %v153 = vld [vmem:[%s8 + $0x14] sm:$0xf]
    %v154 = vld [vmem:[%s8 + $0x18] sm:$0xf]
    %v155 = vld [vmem:[%s8 + $0x1c] sm:$0xf]
    %v156 = vld [vmem:[%s8 + $0x20] sm:$0xf]
    %v157 = vld [vmem:[%s8 + $0x24] sm:$0xf]
    %v158 = vld [vmem:[%s8 + $0x28] sm:$0xf]
    %v159 = vld [vmem:[%s8 + $0x2c] sm:$0xf]
    %v160 = vld [vmem:[%s8 + $0x30] sm:$0xf]
    %v161 = vld [vmem:[%s8 + $0x34] sm:$0xf]
    %v162 = vld [vmem:[%s8 + $0x38] sm:$0xf]
    %v163 = vld [vmem:[%s8 + $0x3c] sm:$0xf]
    %v164 = vld [vmem:[%s9] sm:$0xf]
    %v165 = vld [vmem:[%s9 + $0x4] sm:$0xf]
    %v166 = vld [vmem:[%s9 + $0x8] sm:$0xf]
    %v167 = vld [vmem:[%s9 + $0xc] sm:$0xf]
    %v168 = vld [vmem:[%s9 + $0x10] sm:$0xf]
    %v169 = vld [vmem:[%s9 + $0x14] sm:$0xf]
    %v170 = vld [vmem:[%s9 + $0x18] sm:$0xf]
    %v171 = vld [vmem:[%s9 + $0x1c] sm:$0xf]
    %v172 = vld [vmem:[%s9 + $0x20] sm:$0xf]
    %v173 = vld [vmem:[%s9 + $0x24] sm:$0xf]
    %v174 = vld [vmem:[%s9 + $0x28] sm:$0xf]
    %v175 = vld [vmem:[%s9 + $0x2c] sm:$0xf]
    %v176 = vld [vmem:[%s9 + $0x30] sm:$0xf]
    %v177 = vld [vmem:[%s9 + $0x34] sm:$0xf]
    %v178 = vld [vmem:[%s9 + $0x38] sm:$0xf]
    %v179 = vld [vmem:[%s9 + $0x3c] sm:$0xf]
    %v196 = vunpack.c.l.b16 %v164
    %v197 = vunpack.c.l.b16 %v165
    %v198 = vunpack.c.l.b16 %v166
    %v199 = vunpack.c.l.b16 %v167
    %v200 = vunpack.c.l.b16 %v168
    %v201 = vunpack.c.l.b16 %v169
    %v202 = vunpack.c.l.b16 %v170
    %v203 = vunpack.c.l.b16 %v171
    %v204 = vunpack.c.l.b16 %v172
    %v205 = vunpack.c.l.b16 %v173
    %v206 = vunpack.c.l.b16 %v174
    %v207 = vunpack.c.l.b16 %v175
    %v208 = vunpack.c.l.b16 %v176
    %v209 = vunpack.c.l.b16 %v177
    %v210 = vunpack.c.l.b16 %v178
    %v211 = vunpack.c.l.b16 %v179
    %v212 = vpack.c.b16 %v197, %v196
    %v213 = vpack.c.b16 %v199, %v198
    %v214 = vpack.c.b16 %v201, %v200
    %v215 = vpack.c.b16 %v203, %v202
    %v216 = vpack.c.b16 %v205, %v204
    %v217 = vpack.c.b16 %v207, %v206
    %v218 = vpack.c.b16 %v209, %v208
    %v219 = vpack.c.b16 %v211, %v210
    %228 = vmatpush.bf16.msra.mxu0 %v219
    %229 = vmatpush.bf16.msra.mxu0 %v218
    %230 = vmatpush.bf16.msra.mxu0 %v217
    %231 = vmatpush.bf16.msra.mxu0 %v216
    %232 = vmatpush.bf16.msra.mxu0 %v215
    %233 = vmatpush.bf16.msra.mxu0 %v214
    %234 = vmatpush.bf16.msra.mxu0 %v213
    %235 = vmatpush.bf16.msra.mxu0 %v212
    %236 = vmatmul.bf16.gmra.mxu0 %v146
    %v237 = vpop.f32.mrf.mxu0
    %v238 = vadd.f32 0.0, %v237
    %v239 = vpop.f32.mrf.mxu0
    %v240 = vadd.f32 0.0, %v239
    %241 = vdwg.mxu0
    %v258 = vunpack.c.l.b16 %v148
    %v259 = vunpack.c.l.b16 %v149
    %v260 = vunpack.c.l.b16 %v150
    %v261 = vunpack.c.l.b16 %v151
    %v262 = vunpack.c.l.b16 %v152
    %v263 = vunpack.c.l.b16 %v153
    %v264 = vunpack.c.l.b16 %v154
    %v265 = vunpack.c.l.b16 %v155
    %v266 = vunpack.c.l.b16 %v156
    %v267 = vunpack.c.l.b16 %v157
    %v268 = vunpack.c.l.b16 %v158
    %v269 = vunpack.c.l.b16 %v159
    %v270 = vunpack.c.l.b16 %v160
    %v271 = vunpack.c.l.b16 %v161
    %v272 = vunpack.c.l.b16 %v162
    %v273 = vunpack.c.l.b16 %v163
    %v274 = vpack.c.b16 %v259, %v258
    %v275 = vpack.c.b16 %v261, %v260
    %v276 = vpack.c.b16 %v263, %v262
    %v277 = vpack.c.b16 %v265, %v264
    %v278 = vpack.c.b16 %v267, %v266
    %v279 = vpack.c.b16 %v269, %v268
    %v280 = vpack.c.b16 %v271, %v270
    %v281 = vpack.c.b16 %v273, %v272
    %290 = vmatpush.bf16.msra.mxu0 %v281
    %291 = vmatpush.bf16.msra.mxu0 %v280
    %292 = vmatpush.bf16.msra.mxu0 %v279
    %293 = vmatpush.bf16.msra.mxu0 %v278
    %294 = vmatpush.bf16.msra.mxu0 %v277
    %295 = vmatpush.bf16.msra.mxu0 %v276
    %296 = vmatpush.bf16.msra.mxu0 %v275
    %297 = vmatpush.bf16.msra.mxu0 %v274
    %298 = vmatmul.bf16.gmra.mxu0 %v147
    %v299 = vpop.f32.mrf.mxu0
    %v300 = vadd.f32 %v238, %v299
    %v301 = vpop.f32.mrf.mxu0
    %v302 = vadd.f32 %v240, %v301
    %303 = vdwg.mxu0
    %v304 = vld [vmem:[%s10] sm:$0x1]
    %v306 = vperm.slane %v304, 0
    %v308 = vadd.f32 %v300, %v306
    %v309 = vadd.f32 %v302, %v306
    %v310 = vmul.f32 %v308, %v308
    %v311 = vmul.f32 %v309, %v309
    %312 = vadd.xlane.f32.xlu0 %v310
    %v313 = vpop.xlane.xlu0 %312
    %314 = vadd.xlane.f32.xlu0 %v311
    %v315 = vpop.xlane.xlu0 %314
    %v316 = vmax.f32 %v313, 1e-24
    %v317 = vmax.f32 %v315, 1e-24
    %v318 = vrsqrt.pop %v316
    %v319 = vmul.f32 %v318, %v316
    %v320 = vmul.f32 %v319, %v318
    %v321 = vmul.f32 0.5, %v320
    %v322 = vsub.f32 1.5, %v321
    %v323 = vmul.f32 %v318, %v322
    %vm324 = vweird.f32 %v316
    %vm325 = vweird.f32 %v318
    %vm326 = vmor %vm324, %vm325
    %v327 = vsel %vm326, %v318, %v323
    %v328 = vrsqrt.pop %v317
    %v329 = vmul.f32 %v328, %v317
    %v330 = vmul.f32 %v329, %v328
    %v331 = vmul.f32 0.5, %v330
    %v332 = vsub.f32 1.5, %v331
    %v333 = vmul.f32 %v328, %v332
    %vm334 = vweird.f32 %v317
    %vm335 = vweird.f32 %v328
    %vm336 = vmor %vm334, %vm335
    %v337 = vsel %vm336, %v328, %v333
    %v338 = vmul.f32 %v308, %v327
    %v339 = vmul.f32 %v309, %v337
    %v340 = vld [vmem:[%s11] sm:$0xf]
    %v341 = vld [vmem:[%s11 + $0x4] sm:$0xf]
    %v342 = vld [vmem:[%s11 + $0x8] sm:$0xf]
    %v343 = vld [vmem:[%s11 + $0xc] sm:$0xf]
    %v344 = vld [vmem:[%s11 + $0x10] sm:$0xf]
    %v345 = vld [vmem:[%s11 + $0x14] sm:$0xf]
    %v346 = vld [vmem:[%s11 + $0x18] sm:$0xf]
    %v347 = vld [vmem:[%s11 + $0x1c] sm:$0xf]
    %v348 = vld [vmem:[%s11 + $0x20] sm:$0xf]
    %v349 = vld [vmem:[%s11 + $0x24] sm:$0xf]
    %v350 = vld [vmem:[%s11 + $0x28] sm:$0xf]
    %v351 = vld [vmem:[%s11 + $0x2c] sm:$0xf]
    %v352 = vld [vmem:[%s11 + $0x30] sm:$0xf]
    %v353 = vld [vmem:[%s11 + $0x34] sm:$0xf]
    %v354 = vld [vmem:[%s11 + $0x38] sm:$0xf]
    %v355 = vld [vmem:[%s11 + $0x3c] sm:$0xf]
    %v356 = vld [vmem:[%s12] sm:$0xf]
    %v357 = vld [vmem:[%s12 + $0x4] sm:$0xf]
    %v358 = vld [vmem:[%s12 + $0x8] sm:$0xf]
    %v359 = vld [vmem:[%s12 + $0xc] sm:$0xf]
    %v360 = vld [vmem:[%s12 + $0x10] sm:$0xf]
    %v361 = vld [vmem:[%s12 + $0x14] sm:$0xf]
    %v362 = vld [vmem:[%s12 + $0x18] sm:$0xf]
    %v363 = vld [vmem:[%s12 + $0x1c] sm:$0xf]
    %v364 = vld [vmem:[%s12 + $0x20] sm:$0xf]
    %v365 = vld [vmem:[%s12 + $0x24] sm:$0xf]
    %v366 = vld [vmem:[%s12 + $0x28] sm:$0xf]
    %v367 = vld [vmem:[%s12 + $0x2c] sm:$0xf]
    %v368 = vld [vmem:[%s12 + $0x30] sm:$0xf]
    %v369 = vld [vmem:[%s12 + $0x34] sm:$0xf]
    %v370 = vld [vmem:[%s12 + $0x38] sm:$0xf]
    %v371 = vld [vmem:[%s12 + $0x3c] sm:$0xf]
    %v388 = vunpack.c.l.b16 %v356
    %v389 = vunpack.c.l.b16 %v357
    %v390 = vunpack.c.l.b16 %v358
    %v391 = vunpack.c.l.b16 %v359
    %v392 = vunpack.c.l.b16 %v360
    %v393 = vunpack.c.l.b16 %v361
    %v394 = vunpack.c.l.b16 %v362
    %v395 = vunpack.c.l.b16 %v363
    %v396 = vunpack.c.l.b16 %v364
    %v397 = vunpack.c.l.b16 %v365
    %v398 = vunpack.c.l.b16 %v366
    %v399 = vunpack.c.l.b16 %v367
    %v400 = vunpack.c.l.b16 %v368
    %v401 = vunpack.c.l.b16 %v369
    %v402 = vunpack.c.l.b16 %v370
    %v403 = vunpack.c.l.b16 %v371
    %v404 = vpack.c.b16 %v389, %v388
    %v405 = vpack.c.b16 %v391, %v390
    %v406 = vpack.c.b16 %v393, %v392
    %v407 = vpack.c.b16 %v395, %v394
    %v408 = vpack.c.b16 %v397, %v396
    %v409 = vpack.c.b16 %v399, %v398
    %v410 = vpack.c.b16 %v401, %v400
    %v411 = vpack.c.b16 %v403, %v402
    %420 = vmatpush.bf16.msra.mxu0 %v411
    %421 = vmatpush.bf16.msra.mxu0 %v410
    %422 = vmatpush.bf16.msra.mxu0 %v409
    %423 = vmatpush.bf16.msra.mxu0 %v408
    %424 = vmatpush.bf16.msra.mxu0 %v407
    %425 = vmatpush.bf16.msra.mxu0 %v406
    %426 = vmatpush.bf16.msra.mxu0 %v405
    %427 = vmatpush.bf16.msra.mxu0 %v404
    %428 = vmatmul.bf16.gmra.mxu0 %v146
    %v429 = vpop.f32.mrf.mxu0
    %v430 = vadd.f32 0.0, %v429
    %v431 = vpop.f32.mrf.mxu0
    %v432 = vadd.f32 0.0, %v431
    %433 = vdwg.mxu0
    %v450 = vunpack.c.l.b16 %v340
    %v451 = vunpack.c.l.b16 %v341
    %v452 = vunpack.c.l.b16 %v342
    %v453 = vunpack.c.l.b16 %v343
    %v454 = vunpack.c.l.b16 %v344
    %v455 = vunpack.c.l.b16 %v345
    %v456 = vunpack.c.l.b16 %v346
    %v457 = vunpack.c.l.b16 %v347
    %v458 = vunpack.c.l.b16 %v348
    %v459 = vunpack.c.l.b16 %v349
    %v460 = vunpack.c.l.b16 %v350
    %v461 = vunpack.c.l.b16 %v351
    %v462 = vunpack.c.l.b16 %v352
    %v463 = vunpack.c.l.b16 %v353
    %v464 = vunpack.c.l.b16 %v354
    %v465 = vunpack.c.l.b16 %v355
    %v466 = vpack.c.b16 %v451, %v450
    %v467 = vpack.c.b16 %v453, %v452
    %v468 = vpack.c.b16 %v455, %v454
    %v469 = vpack.c.b16 %v457, %v456
    %v470 = vpack.c.b16 %v459, %v458
    %v471 = vpack.c.b16 %v461, %v460
    %v472 = vpack.c.b16 %v463, %v462
    %v473 = vpack.c.b16 %v465, %v464
    %482 = vmatpush.bf16.msra.mxu0 %v473
    %483 = vmatpush.bf16.msra.mxu0 %v472
    %484 = vmatpush.bf16.msra.mxu0 %v471
    %485 = vmatpush.bf16.msra.mxu0 %v470
    %486 = vmatpush.bf16.msra.mxu0 %v469
    %487 = vmatpush.bf16.msra.mxu0 %v468
    %488 = vmatpush.bf16.msra.mxu0 %v467
    %489 = vmatpush.bf16.msra.mxu0 %v466
    %490 = vmatmul.bf16.gmra.mxu0 %v145
    %v491 = vpop.f32.mrf.mxu0
    %v492 = vadd.f32 %v430, %v491
    %v493 = vpop.f32.mrf.mxu0
    %v494 = vadd.f32 %v432, %v493
    %495 = vdwg.mxu0
    %v496 = vpack.c.bf16 %v339, %v338
    %v497 = vld [vmem:[%s13] sm:$0xf]
    %v498 = vld [vmem:[%s13 + $0x4] sm:$0xf]
    %v499 = vld [vmem:[%s13 + $0x8] sm:$0xf]
    %v500 = vld [vmem:[%s13 + $0xc] sm:$0xf]
    %v501 = vld [vmem:[%s13 + $0x10] sm:$0xf]
    %v502 = vld [vmem:[%s13 + $0x14] sm:$0xf]
    %v503 = vld [vmem:[%s13 + $0x18] sm:$0xf]
    %v504 = vld [vmem:[%s13 + $0x1c] sm:$0xf]
    %v505 = vld [vmem:[%s13 + $0x20] sm:$0xf]
    %v506 = vld [vmem:[%s13 + $0x24] sm:$0xf]
    %v507 = vld [vmem:[%s13 + $0x28] sm:$0xf]
    %v508 = vld [vmem:[%s13 + $0x2c] sm:$0xf]
    %v509 = vld [vmem:[%s13 + $0x30] sm:$0xf]
    %v510 = vld [vmem:[%s13 + $0x34] sm:$0xf]
    %v511 = vld [vmem:[%s13 + $0x38] sm:$0xf]
    %v512 = vld [vmem:[%s13 + $0x3c] sm:$0xf]
    %v529 = vunpack.c.l.b16 %v497
    %v530 = vunpack.c.l.b16 %v498
    %v531 = vunpack.c.l.b16 %v499
    %v532 = vunpack.c.l.b16 %v500
    %v533 = vunpack.c.l.b16 %v501
    %v534 = vunpack.c.l.b16 %v502
    %v535 = vunpack.c.l.b16 %v503
    %v536 = vunpack.c.l.b16 %v504
    %v537 = vunpack.c.l.b16 %v505
    %v538 = vunpack.c.l.b16 %v506
    %v539 = vunpack.c.l.b16 %v507
    %v540 = vunpack.c.l.b16 %v508
    %v541 = vunpack.c.l.b16 %v509
    %v542 = vunpack.c.l.b16 %v510
    %v543 = vunpack.c.l.b16 %v511
    %v544 = vunpack.c.l.b16 %v512
    %v545 = vpack.c.b16 %v530, %v529
    %v546 = vpack.c.b16 %v532, %v531
    %v547 = vpack.c.b16 %v534, %v533
    %v548 = vpack.c.b16 %v536, %v535
    %v549 = vpack.c.b16 %v538, %v537
    %v550 = vpack.c.b16 %v540, %v539
    %v551 = vpack.c.b16 %v542, %v541
    %v552 = vpack.c.b16 %v544, %v543
    %561 = vmatpush.bf16.msra.mxu0 %v552
    %562 = vmatpush.bf16.msra.mxu0 %v551
    %563 = vmatpush.bf16.msra.mxu0 %v550
    %564 = vmatpush.bf16.msra.mxu0 %v549
    %565 = vmatpush.bf16.msra.mxu0 %v548
    %566 = vmatpush.bf16.msra.mxu0 %v547
    %567 = vmatpush.bf16.msra.mxu0 %v546
    %568 = vmatpush.bf16.msra.mxu0 %v545
    %569 = vmatmul.bf16.gmra.mxu0 %v496
    %v570 = vpop.f32.mrf.mxu0
    %v571 = vadd.f32 0.0, %v570
    %v572 = vpop.f32.mrf.mxu0
    %v573 = vadd.f32 0.0, %v572
    %574 = vdwg.mxu0
    %v575 = vadd.f32 %v492, %v571
    %v576 = vadd.f32 %v494, %v573
    %v577 = vld [vmem:[%s14] sm:$0x1]
    %v579 = vperm.slane %v577, 0
    %v581 = vadd.f32 %v575, %v579
    %v582 = vadd.f32 %v576, %v579
    %583 = vst [vmem:[#allocation2] sm:$0xff] %v581
    %584 = vst [vmem:[#allocation2 + $0x8] sm:$0xff] %v582
    // Predicated region
    $region62: #{sage_convolutions_forward.5} parent=1 // pred_check
      _
    $region63: #{sage_convolutions_forward.5} parent=1 // pred_check_branch
      %586 = sbr.rel (0) target = $region65
    $region64: #{sage_convolutions_forward.5} parent=1 // pred_region
      %588 = vsyncadd [#allocation3], 0
      %s589 = sshll.u32 [#allocation2], 4
      %s590 = int_to_ptr.vmem [resolvable:$true] %s589
      %s591 = sshll.u32 %s15, 4
      %s592 = int_to_ptr.hbm [resolvable:$true] %s591
      %597 = dma.vmem_to_hbm [thread:$0]  %s590, 256, %s592, [#allocation3], 128, 128, 8
    $region65: #{sage_convolutions_forward.5} parent=1 // pred_fallthru
      _
    // Predicated region
    $region66: #{sage_convolutions_forward.5} parent=1 // pred_check
      _
    $region67: #{sage_convolutions_forward.5} parent=1 // pred_check_branch
      %599 = sbr.rel (0) target = $region69
    $region68: #{sage_convolutions_forward.5} parent=1 // pred_region
      %601 = dma.done [#allocation3], 256
    $region69: #{sage_convolutions_forward.5} parent=1 // pred_fallthru
      _
    %602 = vsyncpa [#allocation3], 1

</llo_original>
